<compile_context>
chip_gen: v6e
topology: v6e:2x2x1
jax: 0.10.0
libtpu: 0.0.40
codegen_flags: <defaults>
</compile_context>

<pallas_src>
import functools

import jax
import jax.numpy as jnp
from jax import lax
from jax.experimental import pallas as pl
from jax.experimental.pallas import tpu as pltpu


def _attention_kernel(x_ref, wq_ref, wkv_ref, wp_ref, wxv_ref, b_ref,
                      x_out_ref, x_ori_out_ref,
                      k_scr, v_scr, o_scr,
                      *, num_heads: int, head_dim: int, q_tile: int):
    C = num_heads * head_dim
    qi = pl.program_id(1)

    # ---- K/V for the whole sequence: one full-width (N,C)@(C,2C) MXU pass,
    #      computed once per batch element (qi == 0) and persisted in
    #      lane-dense bf16 VMEM scratch across the sequential q-tile axis. ----
    @pl.when(qi == 0)
    def _():
        kv = jnp.dot(x_ref[0], wkv_ref[...],
                     preferred_element_type=jnp.float32)            # (N, 2C) f32
        k_scr[...] = kv[:, :C].astype(jnp.bfloat16)
        v_scr[...] = kv[:, C:].astype(jnp.bfloat16)

    row0 = qi * q_tile
    if q_tile % 8 == 0:
        row0 = pl.multiple_of(row0, 8)
    xq = x_ref[0, pl.ds(row0, q_tile), :]                           # (TQ, C) bf16

    # Q for this tile at full C width; the qk scale is pre-folded into Wq.
    q = jnp.dot(xq, wq_ref[...],
                preferred_element_type=jnp.float32).astype(jnp.bfloat16)

    # Per-head attention.  Heads are static lane slices of lane-dense buffers;
    # each head's output goes straight into its lane slice of o_scr so the
    # large (TQ, N) score block does not stay live across iterations.
    # (Static unroll: num_heads is small; a fori_loop would need dynamic lane
    #  offsets for the head slices, which lowers poorly on TPU.)
    for h in range(num_heads):
        sl = slice(h * head_dim, (h + 1) * head_dim)
        qh = q[:, sl]                                               # (TQ, hd) bf16
        kh = k_scr[:, sl]                                           # (N, hd)  bf16
        vh = v_scr[:, sl]                                           # (N, hd)  bf16

        # q @ k^T without an explicit transpose (contract the head dims).
        s = lax.dot_general(qh, kh, (((1,), (1,)), ((), ())),
                            preferred_element_type=jnp.float32)     # (TQ, N) f32
        s = s - jnp.max(s, axis=-1, keepdims=True)
        p = jnp.exp(s)
        inv = pl.reciprocal(jnp.sum(p, axis=-1, keepdims=True), approx=True)
        p = (p * inv).astype(jnp.bfloat16)
        o_scr[:, sl] = jnp.dot(p, vh, preferred_element_type=jnp.float32)

    bias = b_ref[...]                                               # (1, C) f32
    # Output projections: two full-width (TQ, C)@(C, C) MXU passes.
    x_ori = jnp.dot(o_scr[...].astype(jnp.bfloat16), wp_ref[...],
                    preferred_element_type=jnp.float32)             # (TQ, C)
    x_v = jnp.dot(xq, wxv_ref[...],
                  preferred_element_type=jnp.float32)               # (TQ, C)
    x_out_ref[0] = (x_v + bias).astype(x_out_ref.dtype)
    x_ori_out_ref[0] = (x_ori + bias).astype(x_ori_out_ref.dtype)


def _pick_q_tile(n: int, cap: int) -> int:
    if n <= cap:
        return n
    for t in (512, 256, 128, 64, 32, 16, 8):
        if t <= cap and n % t == 0:
            return t
    # No usable divisor (prime-ish N): legal fallback is a single full-N tile.
    return n


def _tile_vmem_bytes(rows: int, cols: int, itemsize: int) -> int:
    """VMEM bytes of a (rows, cols) block after (sublane, 128-lane) padding."""
    sub = max(8, 32 // itemsize)            # f32 -> 8 sublanes, bf16 -> 16
    r = -(-rows // sub) * sub
    c = -(-cols // 128) * 128
    return r * c * itemsize


def attention_forward(x, w_qkv, w_proj, b_proj, *, num_heads=8, qk_scale=None):
    """Pallas implementation of Attention.forward.

    x:      (B, N, C) float32
    w_qkv:  (3C, C)   nn.Linear(dim, 3*dim).weight  (qkv_bias=False)
    w_proj: (C, C)    nn.Linear(out_dim, dim).weight (out_dim == dim)
    b_proj: (C,)      proj bias
    returns [x_out, x_ori_out], each (B, N, C)
    """
    B, N, C = x.shape
    assert C % num_heads == 0
    hd = C // num_heads
    scale = float(qk_scale) if qk_scale is not None else hd ** (-0.5)

    # Generation-aware knobs (v5e/v6e: 128 MiB VMEM; v7x: 64 MiB per TC).
    try:
        vmem_cap = int(pltpu.get_tpu_info().vmem_capacity_bytes)
    except Exception:
        vmem_cap = 64 * 1024 * 1024
    q_tile = _pick_q_tile(N, 512 if vmem_cap >= 96 * 1024 * 1024 else 256)
    nq = N // q_tile

    w_qkv = jnp.asarray(w_qkv, jnp.float32)
    w_proj = jnp.asarray(w_proj, jnp.float32)
    b_proj = jnp.asarray(b_proj, jnp.float32)

    wq = w_qkv[0 * C:1 * C]                 # (C, C) rows = output channels
    wk = w_qkv[1 * C:2 * C]
    wv = w_qkv[2 * C:3 * C]

    # nn.Linear computes y = x @ W^T, so ship transposed (C_in, C_out) blocks.
    wq_s = (wq.T * scale).astype(jnp.bfloat16)                         # (C, C)
    wkv_t = jnp.concatenate([wk.T, wv.T], axis=1).astype(jnp.bfloat16)  # (C, 2C)
    wp_t = w_proj.T.astype(jnp.bfloat16)                               # (C, C)
    # Algebraic x-path fusion: proj(head_merge(v)) == x @ (Wv^T @ Wproj^T) + b.
    wxv = (wv.T @ w_proj.T).astype(jnp.bfloat16)                       # (C, C)
    bias = b_proj.reshape(1, C).astype(jnp.float32)
    x_bf = x.astype(jnp.bfloat16)

    # VMEM budget from padded shapes (weights single-buffered, x/outputs
    # double-buffered, K/V + attn-output scratch, score-block headroom).
    need = (2 * _tile_vmem_bytes(N, C, 2)
            + 3 * _tile_vmem_bytes(C, C, 2)
            + _tile_vmem_bytes(C, 2 * C, 2)
            + _tile_vmem_bytes(1, C, 4)
            + 2 * 2 * _tile_vmem_bytes(q_tile, C, 4)
            + 2 * _tile_vmem_bytes(N, C, 2)
            + _tile_vmem_bytes(q_tile, C, 4)
            + 2 * _tile_vmem_bytes(q_tile, N, 4))
    vmem_limit = int(min(int(0.85 * vmem_cap),
                         max(32 * 1024 * 1024, int(need * 1.5))))

    cost = pl.CostEstimate(
        flops=2 * B * N * C * (5 * C + 2 * N),
        transcendentals=B * num_heads * N * N,
        bytes_accessed=(B * N * C * 2 + 2 * B * N * C * 4
                        + 5 * C * C * 2 + C * 4),
    )

    kernel = functools.partial(_attention_kernel, num_heads=num_heads,
                               head_dim=hd, q_tile=q_tile)

    def w_spec(shape):
        return pl.BlockSpec(shape, lambda b, q: (0, 0),
                            pipeline_mode=pl.Buffered(1))

    grid_spec = pltpu.PrefetchScalarGridSpec(
        num_scalar_prefetch=0,
        grid=(B, nq),
        in_specs=[
            pl.BlockSpec((1, N, C), lambda b, q: (b, 0, 0)),   # x (bf16, full seq)
            w_spec((C, C)),                                    # Wq^T * scale
            w_spec((C, 2 * C)),                                # [Wk^T | Wv^T]
            w_spec((C, C)),                                    # Wproj^T
            w_spec((C, C)),                                    # fused Wv^T @ Wproj^T
            w_spec((1, C)),                                    # proj bias
        ],
        out_specs=[
            pl.BlockSpec((1, q_tile, C), lambda b, q: (b, q, 0)),
            pl.BlockSpec((1, q_tile, C), lambda b, q: (b, q, 0)),
        ],
        scratch_shapes=[
            pltpu.VMEM((N, C), jnp.bfloat16),      # K (all heads, lane-dense)
            pltpu.VMEM((N, C), jnp.bfloat16),      # V (all heads, lane-dense)
            pltpu.VMEM((q_tile, C), jnp.float32),  # attn output, heads on lanes
        ],
    )

    out_shape = (jax.ShapeDtypeStruct((B, N, C), x.dtype),
                 jax.ShapeDtypeStruct((B, N, C), x.dtype))

    return pl.pallas_call(
        kernel,
        out_shape=out_shape,
        grid_spec=grid_spec,
        compiler_params=pltpu.CompilerParams(
            dimension_semantics=("parallel", "arbitrary"),
            vmem_limit_bytes=vmem_limit,
        ),
        cost_estimate=cost,
    )(x_bf, wq_s, wkv_t, wp_t, wxv, bias)


def attention_reference(x, w_qkv, w_proj, b_proj, *, num_heads=8, qk_scale=None):
    """Pure-JAX (f32) replica of the PyTorch forward (settings='' / eval mode)."""
    B, N, C = x.shape
    hd = C // num_heads
    scale = qk_scale if qk_scale is not None else hd ** (-0.5)
    qkv = jnp.einsum('bnc,dc->bnd', x, w_qkv)                      # (B, N, 3C)
    qkv = qkv.reshape(B, N, 3, num_heads, hd).transpose(2, 0, 3, 1, 4)
    q, k, v = qkv[0], qkv[1], qkv[2]                               # (B, H, N, hd)
    attn_ori = jnp.einsum('bhqd,bhkd->bhqk', q, k) * scale
    attn_ori = jax.nn.softmax(attn_ori, axis=-1)
    x_ori = jnp.einsum('bhqk,bhkd->bhqd', attn_ori, v)
    x_ori = x_ori.transpose(0, 2, 1, 3).reshape(B, N, C)
    x_v = v.transpose(0, 2, 1, 3).reshape(B, N, C)
    proj = lambda t: jnp.einsum('bnc,dc->bnd', t, w_proj) + b_proj
    return [proj(x_v), proj(x_ori)]


if __name__ == "__main__":
    # Small shapes consistent with the module (dim == out_dim == C).
    B, N, C = 2, 16, 64
    num_heads = 8

    key = jax.random.PRNGKey(0)
    kx, kq, kp, kb = jax.random.split(key, 4)
    x = jax.random.normal(kx, (B, N, C), dtype=jnp.float32)
    w_qkv = jax.random.normal(kq, (3 * C, C), dtype=jnp.float32) * 0.05
    w_proj = jax.random.normal(kp, (C, C), dtype=jnp.float32) * 0.05
    b_proj = jax.random.normal(kb, (C,), dtype=jnp.float32) * 0.05

    x_out, x_ori_out = attention_forward(x, w_qkv, w_proj, b_proj,
                                         num_heads=num_heads)
    jax.block_until_ready((x_out, x_ori_out))

    x_ref, x_ori_ref = attention_reference(x, w_qkv, w_proj, b_proj,
                                           num_heads=num_heads)

    def _rel_err(a, b):
        return float(jnp.max(jnp.abs(a - b)) / (jnp.max(jnp.abs(b)) + 1e-8))

    # bf16 MXU operands with f32 accumulation => compare at bf16-level tolerance.
    assert _rel_err(x_out, x_ref) < 2.5e-2, _rel_err(x_out, x_ref)
    assert _rel_err(x_ori_out, x_ori_ref) < 2.5e-2, _rel_err(x_ori_out, x_ori_ref)

    print("KERNEL_OK")
</pallas_src>

<mosaic_0001>
module attributes {stable_mosaic.version = 11 : i64} {
  func.func @_attention_kernel(%arg0: i32, %arg1: i32, %arg2: memref<1x16x64xbf16, #tpu.memory_space<vmem>>, %arg3: memref<64x64xbf16, #tpu.memory_space<vmem>>, %arg4: memref<64x128xbf16, #tpu.memory_space<vmem>>, %arg5: memref<64x64xbf16, #tpu.memory_space<vmem>>, %arg6: memref<64x64xbf16, #tpu.memory_space<vmem>>, %arg7: memref<1x64xf32, #tpu.memory_space<vmem>>, %arg8: memref<1x16x64xf32, #tpu.memory_space<vmem>>, %arg9: memref<1x16x64xf32, #tpu.memory_space<vmem>>, %arg10: memref<16x64xbf16, #tpu.memory_space<vmem>>, %arg11: memref<16x64xbf16, #tpu.memory_space<vmem>>, %arg12: memref<16x64xf32, #tpu.memory_space<vmem>>) attributes {dimension_semantics = [#tpu.dimension_semantics<parallel>, #tpu.dimension_semantics<arbitrary>], iteration_bounds = array<i64: 2, 1>, scalar_prefetch = 0 : i64, scratch_operands = 3 : i64, tpu.core_type = #tpu.core_type<tc>, window_params = [{transform_indices = @transform_0, window_bounds = array<i64: 1, 16, 64>}, {pipeline_mode = #tpu.pipeline_mode<synchronous>, transform_indices = @transform_1, window_bounds = array<i64: 64, 64>}, {pipeline_mode = #tpu.pipeline_mode<synchronous>, transform_indices = @transform_2, window_bounds = array<i64: 64, 128>}, {pipeline_mode = #tpu.pipeline_mode<synchronous>, transform_indices = @transform_3, window_bounds = array<i64: 64, 64>}, {pipeline_mode = #tpu.pipeline_mode<synchronous>, transform_indices = @transform_4, window_bounds = array<i64: 64, 64>}, {pipeline_mode = #tpu.pipeline_mode<synchronous>, transform_indices = @transform_5, window_bounds = array<i64: 1, 64>}, {transform_indices = @transform_6, window_bounds = array<i64: 1, 16, 64>}, {transform_indices = @transform_7, window_bounds = array<i64: 1, 16, 64>}]} {
    %c0_i32 = arith.constant 0 : i32
    %0 = arith.cmpi eq, %arg1, %c0_i32 : i32
    %1 = arith.extui %0 : i1 to i32
    %c0_i32_0 = arith.constant 0 : i32
    %2 = arith.cmpi ne, %1, %c0_i32_0 : i32
    scf.if %2 {
      %c0_93 = arith.constant 0 : index
      %c0_94 = arith.constant 0 : index
      %c0_95 = arith.constant 0 : index
      %164 = vector.load %arg2[%c0_93, %c0_94, %c0_95] : memref<1x16x64xbf16, #tpu.memory_space<vmem>>, vector<1x16x64xbf16>
      %165 = vector.shape_cast %164 : vector<1x16x64xbf16> to vector<16x64xbf16>
      %c0_96 = arith.constant 0 : index
      %c0_97 = arith.constant 0 : index
      %166 = vector.load %arg4[%c0_96, %c0_97] : memref<64x128xbf16, #tpu.memory_space<vmem>>, vector<64x128xbf16>
      %cst_98 = arith.constant dense<0.000000e+00> : vector<16x128xf32>
      %167 = tpu.matmul %165, %166, %cst_98 {dimension_numbers = #tpu.dot_dimension_numbers<[1], [0], [0], [1], [0, 0, 1, 1], [], []>} : vector<16x64xbf16>, vector<64x128xbf16>, vector<16x128xf32> -> vector<16x128xf32>
      %168 = vector.extract_strided_slice %167 {offsets = [0, 0], sizes = [16, 64], strides = [1, 1]} : vector<16x128xf32> to vector<16x64xf32>
      %169 = arith.truncf %168 : vector<16x64xf32> to vector<16x64xbf16>
      %c0_99 = arith.constant 0 : index
      %c0_100 = arith.constant 0 : index
      %170 = vector.load %arg10[%c0_99, %c0_100] : memref<16x64xbf16, #tpu.memory_space<vmem>>, vector<16x64xbf16>
      tpu.vector_store %arg10[%c0_99, %c0_100], %169 {strides = array<i32>} : memref<16x64xbf16, #tpu.memory_space<vmem>>, vector<16x64xbf16>,
      %171 = vector.extract_strided_slice %167 {offsets = [0, 64], sizes = [16, 64], strides = [1, 1]} : vector<16x128xf32> to vector<16x64xf32>
      %172 = arith.truncf %171 : vector<16x64xf32> to vector<16x64xbf16>
      %c0_101 = arith.constant 0 : index
      %c0_102 = arith.constant 0 : index
      %173 = vector.load %arg11[%c0_101, %c0_102] : memref<16x64xbf16, #tpu.memory_space<vmem>>, vector<16x64xbf16>
      tpu.vector_store %arg11[%c0_101, %c0_102], %172 {strides = array<i32>} : memref<16x64xbf16, #tpu.memory_space<vmem>>, vector<16x64xbf16>,
    } else {
    }
    %c16_i32 = arith.constant 16 : i32
    %3 = arith.muli %arg1, %c16_i32 : i32
    %4 = tpu.assume_multiple %3, 8 : i32
    %c0 = arith.constant 0 : index
    %5 = arith.index_cast %4 : i32 to index
    %c0_1 = arith.constant 0 : index
    %6 = vector.load %arg2[%c0, %5, %c0_1] : memref<1x16x64xbf16, #tpu.memory_space<vmem>>, vector<1x16x64xbf16>
    %7 = vector.shape_cast %6 : vector<1x16x64xbf16> to vector<16x64xbf16>
    %c0_2 = arith.constant 0 : index
    %c0_3 = arith.constant 0 : index
    %8 = vector.load %arg3[%c0_2, %c0_3] : memref<64x64xbf16, #tpu.memory_space<vmem>>, vector<64x64xbf16>
    %cst = arith.constant dense<0.000000e+00> : vector<16x64xf32>
    %9 = tpu.matmul %7, %8, %cst {dimension_numbers = #tpu.dot_dimension_numbers<[1], [0], [0], [1], [0, 0, 1, 1], [], []>} : vector<16x64xbf16>, vector<64x64xbf16>, vector<16x64xf32> -> vector<16x64xf32>
    %10 = arith.truncf %9 : vector<16x64xf32> to vector<16x64xbf16>
    %11 = vector.extract_strided_slice %10 {offsets = [0, 0], sizes = [16, 8], strides = [1, 1]} : vector<16x64xbf16> to vector<16x8xbf16>
    %c0_4 = arith.constant 0 : index
    %c0_5 = arith.constant 0 : index
    %12 = vector.load %arg10[%c0_4, %c0_5] : memref<16x64xbf16, #tpu.memory_space<vmem>>, vector<16x8xbf16>
    %c0_6 = arith.constant 0 : index
    %c0_7 = arith.constant 0 : index
    %13 = vector.load %arg11[%c0_6, %c0_7] : memref<16x64xbf16, #tpu.memory_space<vmem>>, vector<16x8xbf16>
    %cst_8 = arith.constant dense<0.000000e+00> : vector<16x16xf32>
    %14 = tpu.matmul %11, %12, %cst_8 {dimension_numbers = #tpu.dot_dimension_numbers<[1], [1], [0], [0], [0, 0, 1, 0], [], []>} : vector<16x8xbf16>, vector<16x8xbf16>, vector<16x16xf32> -> vector<16x16xf32>
    %cst_9 = arith.constant dense<0xFF800000> : vector<16xf32>
    %15 = vector.multi_reduction <maximumf>, %14, %cst_9 [1] : vector<16x16xf32> to vector<16xf32>
    %16 = vector.shape_cast %15 : vector<16xf32> to vector<16x1xf32>
    %17 = vector.broadcast %16 : vector<16x1xf32> to vector<16x16xf32>
    %18 = arith.subf %14, %17 : vector<16x16xf32>
    %19 = math.exp %18 : vector<16x16xf32>
    %cst_10 = arith.constant dense<0.000000e+00> : vector<16xf32>
    %20 = vector.multi_reduction <add>, %19, %cst_10 [1] : vector<16x16xf32> to vector<16xf32>
    %21 = vector.shape_cast %20 : vector<16xf32> to vector<16x1xf32>
    %22 = tpu.reciprocal %21 {approx = true} : vector<16x1xf32> -> vector<16x1xf32>
    %23 = vector.broadcast %22 : vector<16x1xf32> to vector<16x16xf32>
    %24 = arith.mulf %19, %23 : vector<16x16xf32>
    %25 = arith.truncf %24 : vector<16x16xf32> to vector<16x16xbf16>
    %cst_11 = arith.constant dense<0.000000e+00> : vector<16x8xf32>
    %26 = tpu.matmul %25, %13, %cst_11 {dimension_numbers = #tpu.dot_dimension_numbers<[1], [0], [0], [1], [0, 0, 1, 1], [], []>} : vector<16x16xbf16>, vector<16x8xbf16>, vector<16x8xf32> -> vector<16x8xf32>
    %c0_12 = arith.constant 0 : index
    %c0_13 = arith.constant 0 : index
    %27 = vector.load %arg12[%c0_12, %c0_13] : memref<16x64xf32, #tpu.memory_space<vmem>>, vector<16x8xf32>
    tpu.vector_store %arg12[%c0_12, %c0_13], %26 {strides = array<i32>} : memref<16x64xf32, #tpu.memory_space<vmem>>, vector<16x8xf32>,
    %28 = vector.extract_strided_slice %10 {offsets = [0, 8], sizes = [16, 8], strides = [1, 1]} : vector<16x64xbf16> to vector<16x8xbf16>
    %c0_14 = arith.constant 0 : index
    %c8 = arith.constant 8 : index
    %29 = vector.load %arg10[%c0_14, %c8] : memref<16x64xbf16, #tpu.memory_space<vmem>>, vector<16x8xbf16>
    %c0_15 = arith.constant 0 : index
    %c8_16 = arith.constant 8 : index
    %30 = vector.load %arg11[%c0_15, %c8_16] : memref<16x64xbf16, #tpu.memory_space<vmem>>, vector<16x8xbf16>
    %cst_17 = arith.constant dense<0.000000e+00> : vector<16x16xf32>
    %31 = tpu.matmul %28, %29, %cst_17 {dimension_numbers = #tpu.dot_dimension_numbers<[1], [1], [0], [0], [0, 0, 1, 0], [], []>} : vector<16x8xbf16>, vector<16x8xbf16>, vector<16x16xf32> -> vector<16x16xf32>
    %cst_18 = arith.constant dense<0xFF800000> : vector<16xf32>
    %32 = vector.multi_reduction <maximumf>, %31, %cst_18 [1] : vector<16x16xf32> to vector<16xf32>
    %33 = vector.shape_cast %32 : vector<16xf32> to vector<16x1xf32>
    %34 = vector.broadcast %33 : vector<16x1xf32> to vector<16x16xf32>
    %35 = arith.subf %31, %34 : vector<16x16xf32>
    %36 = math.exp %35 : vector<16x16xf32>
    %cst_19 = arith.constant dense<0.000000e+00> : vector<16xf32>
    %37 = vector.multi_reduction <add>, %36, %cst_19 [1] : vector<16x16xf32> to vector<16xf32>
    %38 = vector.shape_cast %37 : vector<16xf32> to vector<16x1xf32>
    %39 = tpu.reciprocal %38 {approx = true} : vector<16x1xf32> -> vector<16x1xf32>
    %40 = vector.broadcast %39 : vector<16x1xf32> to vector<16x16xf32>
    %41 = arith.mulf %36, %40 : vector<16x16xf32>
    %42 = arith.truncf %41 : vector<16x16xf32> to vector<16x16xbf16>
    %cst_20 = arith.constant dense<0.000000e+00> : vector<16x8xf32>
    %43 = tpu.matmul %42, %30, %cst_20 {dimension_numbers = #tpu.dot_dimension_numbers<[1], [0], [0], [1], [0, 0, 1, 1], [], []>} : vector<16x16xbf16>, vector<16x8xbf16>, vector<16x8xf32> -> vector<16x8xf32>
    %c0_21 = arith.constant 0 : index
    %c8_22 = arith.constant 8 : index
    %44 = vector.load %arg12[%c0_21, %c8_22] : memref<16x64xf32, #tpu.memory_space<vmem>>, vector<16x8xf32>
    tpu.vector_store %arg12[%c0_21, %c8_22], %43 {strides = array<i32>} : memref<16x64xf32, #tpu.memory_space<vmem>>, vector<16x8xf32>,
    %45 = vector.extract_strided_slice %10 {offsets = [0, 16], sizes = [16, 8], strides = [1, 1]} : vector<16x64xbf16> to vector<16x8xbf16>
    %c0_23 = arith.constant 0 : index
    %c16 = arith.constant 16 : index
    %46 = vector.load %arg10[%c0_23, %c16] : memref<16x64xbf16, #tpu.memory_space<vmem>>, vector<16x8xbf16>
    %c0_24 = arith.constant 0 : index
    %c16_25 = arith.constant 16 : index
    %47 = vector.load %arg11[%c0_24, %c16_25] : memref<16x64xbf16, #tpu.memory_space<vmem>>, vector<16x8xbf16>
    %cst_26 = arith.constant dense<0.000000e+00> : vector<16x16xf32>
    %48 = tpu.matmul %45, %46, %cst_26 {dimension_numbers = #tpu.dot_dimension_numbers<[1], [1], [0], [0], [0, 0, 1, 0], [], []>} : vector<16x8xbf16>, vector<16x8xbf16>, vector<16x16xf32> -> vector<16x16xf32>
    %cst_27 = arith.constant dense<0xFF800000> : vector<16xf32>
    %49 = vector.multi_reduction <maximumf>, %48, %cst_27 [1] : vector<16x16xf32> to vector<16xf32>
    %50 = vector.shape_cast %49 : vector<16xf32> to vector<16x1xf32>
    %51 = vector.broadcast %50 : vector<16x1xf32> to vector<16x16xf32>
    %52 = arith.subf %48, %51 : vector<16x16xf32>
    %53 = math.exp %52 : vector<16x16xf32>
    %cst_28 = arith.constant dense<0.000000e+00> : vector<16xf32>
    %54 = vector.multi_reduction <add>, %53, %cst_28 [1] : vector<16x16xf32> to vector<16xf32>
    %55 = vector.shape_cast %54 : vector<16xf32> to vector<16x1xf32>
    %56 = tpu.reciprocal %55 {approx = true} : vector<16x1xf32> -> vector<16x1xf32>
    %57 = vector.broadcast %56 : vector<16x1xf32> to vector<16x16xf32>
    %58 = arith.mulf %53, %57 : vector<16x16xf32>
    %59 = arith.truncf %58 : vector<16x16xf32> to vector<16x16xbf16>
    %cst_29 = arith.constant dense<0.000000e+00> : vector<16x8xf32>
    %60 = tpu.matmul %59, %47, %cst_29 {dimension_numbers = #tpu.dot_dimension_numbers<[1], [0], [0], [1], [0, 0, 1, 1], [], []>} : vector<16x16xbf16>, vector<16x8xbf16>, vector<16x8xf32> -> vector<16x8xf32>
    %c0_30 = arith.constant 0 : index
    %c16_31 = arith.constant 16 : index
    %61 = vector.load %arg12[%c0_30, %c16_31] : memref<16x64xf32, #tpu.memory_space<vmem>>, vector<16x8xf32>
    tpu.vector_store %arg12[%c0_30, %c16_31], %60 {strides = array<i32>} : memref<16x64xf32, #tpu.memory_space<vmem>>, vector<16x8xf32>,
    %62 = vector.extract_strided_slice %10 {offsets = [0, 24], sizes = [16, 8], strides = [1, 1]} : vector<16x64xbf16> to vector<16x8xbf16>
    %c0_32 = arith.constant 0 : index
    %c24 = arith.constant 24 : index
    %63 = vector.load %arg10[%c0_32, %c24] : memref<16x64xbf16, #tpu.memory_space<vmem>>, vector<16x8xbf16>
    %c0_33 = arith.constant 0 : index
    %c24_34 = arith.constant 24 : index
    %64 = vector.load %arg11[%c0_33, %c24_34] : memref<16x64xbf16, #tpu.memory_space<vmem>>, vector<16x8xbf16>
    %cst_35 = arith.constant dense<0.000000e+00> : vector<16x16xf32>
    %65 = tpu.matmul %62, %63, %cst_35 {dimension_numbers = #tpu.dot_dimension_numbers<[1], [1], [0], [0], [0, 0, 1, 0], [], []>} : vector<16x8xbf16>, vector<16x8xbf16>, vector<16x16xf32> -> vector<16x16xf32>
    %cst_36 = arith.constant dense<0xFF800000> : vector<16xf32>
    %66 = vector.multi_reduction <maximumf>, %65, %cst_36 [1] : vector<16x16xf32> to vector<16xf32>
    %67 = vector.shape_cast %66 : vector<16xf32> to vector<16x1xf32>
    %68 = vector.broadcast %67 : vector<16x1xf32> to vector<16x16xf32>
    %69 = arith.subf %65, %68 : vector<16x16xf32>
    %70 = math.exp %69 : vector<16x16xf32>
    %cst_37 = arith.constant dense<0.000000e+00> : vector<16xf32>
    %71 = vector.multi_reduction <add>, %70, %cst_37 [1] : vector<16x16xf32> to vector<16xf32>
    %72 = vector.shape_cast %71 : vector<16xf32> to vector<16x1xf32>
    %73 = tpu.reciprocal %72 {approx = true} : vector<16x1xf32> -> vector<16x1xf32>
    %74 = vector.broadcast %73 : vector<16x1xf32> to vector<16x16xf32>
    %75 = arith.mulf %70, %74 : vector<16x16xf32>
    %76 = arith.truncf %75 : vector<16x16xf32> to vector<16x16xbf16>
    %cst_38 = arith.constant dense<0.000000e+00> : vector<16x8xf32>
    %77 = tpu.matmul %76, %64, %cst_38 {dimension_numbers = #tpu.dot_dimension_numbers<[1], [0], [0], [1], [0, 0, 1, 1], [], []>} : vector<16x16xbf16>, vector<16x8xbf16>, vector<16x8xf32> -> vector<16x8xf32>
    %c0_39 = arith.constant 0 : index
    %c24_40 = arith.constant 24 : index
    %78 = vector.load %arg12[%c0_39, %c24_40] : memref<16x64xf32, #tpu.memory_space<vmem>>, vector<16x8xf32>
    tpu.vector_store %arg12[%c0_39, %c24_40], %77 {strides = array<i32>} : memref<16x64xf32, #tpu.memory_space<vmem>>, vector<16x8xf32>,
    %79 = vector.extract_strided_slice %10 {offsets = [0, 32], sizes = [16, 8], strides = [1, 1]} : vector<16x64xbf16> to vector<16x8xbf16>
    %c0_41 = arith.constant 0 : index
    %c32 = arith.constant 32 : index
    %80 = vector.load %arg10[%c0_41, %c32] : memref<16x64xbf16, #tpu.memory_space<vmem>>, vector<16x8xbf16>
    %c0_42 = arith.constant 0 : index
    %c32_43 = arith.constant 32 : index
    %81 = vector.load %arg11[%c0_42, %c32_43] : memref<16x64xbf16, #tpu.memory_space<vmem>>, vector<16x8xbf16>
    %cst_44 = arith.constant dense<0.000000e+00> : vector<16x16xf32>
    %82 = tpu.matmul %79, %80, %cst_44 {dimension_numbers = #tpu.dot_dimension_numbers<[1], [1], [0], [0], [0, 0, 1, 0], [], []>} : vector<16x8xbf16>, vector<16x8xbf16>, vector<16x16xf32> -> vector<16x16xf32>
    %cst_45 = arith.constant dense<0xFF800000> : vector<16xf32>
    %83 = vector.multi_reduction <maximumf>, %82, %cst_45 [1] : vector<16x16xf32> to vector<16xf32>
    %84 = vector.shape_cast %83 : vector<16xf32> to vector<16x1xf32>
    %85 = vector.broadcast %84 : vector<16x1xf32> to vector<16x16xf32>
    %86 = arith.subf %82, %85 : vector<16x16xf32>
    %87 = math.exp %86 : vector<16x16xf32>
    %cst_46 = arith.constant dense<0.000000e+00> : vector<16xf32>
    %88 = vector.multi_reduction <add>, %87, %cst_46 [1] : vector<16x16xf32> to vector<16xf32>
    %89 = vector.shape_cast %88 : vector<16xf32> to vector<16x1xf32>
    %90 = tpu.reciprocal %89 {approx = true} : vector<16x1xf32> -> vector<16x1xf32>
    %91 = vector.broadcast %90 : vector<16x1xf32> to vector<16x16xf32>
    %92 = arith.mulf %87, %91 : vector<16x16xf32>
    %93 = arith.truncf %92 : vector<16x16xf32> to vector<16x16xbf16>
    %cst_47 = arith.constant dense<0.000000e+00> : vector<16x8xf32>
    %94 = tpu.matmul %93, %81, %cst_47 {dimension_numbers = #tpu.dot_dimension_numbers<[1], [0], [0], [1], [0, 0, 1, 1], [], []>} : vector<16x16xbf16>, vector<16x8xbf16>, vector<16x8xf32> -> vector<16x8xf32>
    %c0_48 = arith.constant 0 : index
    %c32_49 = arith.constant 32 : index
    %95 = vector.load %arg12[%c0_48, %c32_49] : memref<16x64xf32, #tpu.memory_space<vmem>>, vector<16x8xf32>
    tpu.vector_store %arg12[%c0_48, %c32_49], %94 {strides = array<i32>} : memref<16x64xf32, #tpu.memory_space<vmem>>, vector<16x8xf32>,
    %96 = vector.extract_strided_slice %10 {offsets = [0, 40], sizes = [16, 8], strides = [1, 1]} : vector<16x64xbf16> to vector<16x8xbf16>
    %c0_50 = arith.constant 0 : index
    %c40 = arith.constant 40 : index
    %97 = vector.load %arg10[%c0_50, %c40] : memref<16x64xbf16, #tpu.memory_space<vmem>>, vector<16x8xbf16>
    %c0_51 = arith.constant 0 : index
    %c40_52 = arith.constant 40 : index
    %98 = vector.load %arg11[%c0_51, %c40_52] : memref<16x64xbf16, #tpu.memory_space<vmem>>, vector<16x8xbf16>
    %cst_53 = arith.constant dense<0.000000e+00> : vector<16x16xf32>
    %99 = tpu.matmul %96, %97, %cst_53 {dimension_numbers = #tpu.dot_dimension_numbers<[1], [1], [0], [0], [0, 0, 1, 0], [], []>} : vector<16x8xbf16>, vector<16x8xbf16>, vector<16x16xf32> -> vector<16x16xf32>
    %cst_54 = arith.constant dense<0xFF800000> : vector<16xf32>
    %100 = vector.multi_reduction <maximumf>, %99, %cst_54 [1] : vector<16x16xf32> to vector<16xf32>
    %101 = vector.shape_cast %100 : vector<16xf32> to vector<16x1xf32>
    %102 = vector.broadcast %101 : vector<16x1xf32> to vector<16x16xf32>
    %103 = arith.subf %99, %102 : vector<16x16xf32>
    %104 = math.exp %103 : vector<16x16xf32>
    %cst_55 = arith.constant dense<0.000000e+00> : vector<16xf32>
    %105 = vector.multi_reduction <add>, %104, %cst_55 [1] : vector<16x16xf32> to vector<16xf32>
    %106 = vector.shape_cast %105 : vector<16xf32> to vector<16x1xf32>
    %107 = tpu.reciprocal %106 {approx = true} : vector<16x1xf32> -> vector<16x1xf32>
    %108 = vector.broadcast %107 : vector<16x1xf32> to vector<16x16xf32>
    %109 = arith.mulf %104, %108 : vector<16x16xf32>
    %110 = arith.truncf %109 : vector<16x16xf32> to vector<16x16xbf16>
    %cst_56 = arith.constant dense<0.000000e+00> : vector<16x8xf32>
    %111 = tpu.matmul %110, %98, %cst_56 {dimension_numbers = #tpu.dot_dimension_numbers<[1], [0], [0], [1], [0, 0, 1, 1], [], []>} : vector<16x16xbf16>, vector<16x8xbf16>, vector<16x8xf32> -> vector<16x8xf32>
    %c0_57 = arith.constant 0 : index
    %c40_58 = arith.constant 40 : index
    %112 = vector.load %arg12[%c0_57, %c40_58] : memref<16x64xf32, #tpu.memory_space<vmem>>, vector<16x8xf32>
    tpu.vector_store %arg12[%c0_57, %c40_58], %111 {strides = array<i32>} : memref<16x64xf32, #tpu.memory_space<vmem>>, vector<16x8xf32>,
    %113 = vector.extract_strided_slice %10 {offsets = [0, 48], sizes = [16, 8], strides = [1, 1]} : vector<16x64xbf16> to vector<16x8xbf16>
    %c0_59 = arith.constant 0 : index
    %c48 = arith.constant 48 : index
    %114 = vector.load %arg10[%c0_59, %c48] : memref<16x64xbf16, #tpu.memory_space<vmem>>, vector<16x8xbf16>
    %c0_60 = arith.constant 0 : index
    %c48_61 = arith.constant 48 : index
    %115 = vector.load %arg11[%c0_60, %c48_61] : memref<16x64xbf16, #tpu.memory_space<vmem>>, vector<16x8xbf16>
    %cst_62 = arith.constant dense<0.000000e+00> : vector<16x16xf32>
    %116 = tpu.matmul %113, %114, %cst_62 {dimension_numbers = #tpu.dot_dimension_numbers<[1], [1], [0], [0], [0, 0, 1, 0], [], []>} : vector<16x8xbf16>, vector<16x8xbf16>, vector<16x16xf32> -> vector<16x16xf32>
    %cst_63 = arith.constant dense<0xFF800000> : vector<16xf32>
    %117 = vector.multi_reduction <maximumf>, %116, %cst_63 [1] : vector<16x16xf32> to vector<16xf32>
    %118 = vector.shape_cast %117 : vector<16xf32> to vector<16x1xf32>
    %119 = vector.broadcast %118 : vector<16x1xf32> to vector<16x16xf32>
    %120 = arith.subf %116, %119 : vector<16x16xf32>
    %121 = math.exp %120 : vector<16x16xf32>
    %cst_64 = arith.constant dense<0.000000e+00> : vector<16xf32>
    %122 = vector.multi_reduction <add>, %121, %cst_64 [1] : vector<16x16xf32> to vector<16xf32>
    %123 = vector.shape_cast %122 : vector<16xf32> to vector<16x1xf32>
    %124 = tpu.reciprocal %123 {approx = true} : vector<16x1xf32> -> vector<16x1xf32>
    %125 = vector.broadcast %124 : vector<16x1xf32> to vector<16x16xf32>
    %126 = arith.mulf %121, %125 : vector<16x16xf32>
    %127 = arith.truncf %126 : vector<16x16xf32> to vector<16x16xbf16>
    %cst_65 = arith.constant dense<0.000000e+00> : vector<16x8xf32>
    %128 = tpu.matmul %127, %115, %cst_65 {dimension_numbers = #tpu.dot_dimension_numbers<[1], [0], [0], [1], [0, 0, 1, 1], [], []>} : vector<16x16xbf16>, vector<16x8xbf16>, vector<16x8xf32> -> vector<16x8xf32>
    %c0_66 = arith.constant 0 : index
    %c48_67 = arith.constant 48 : index
    %129 = vector.load %arg12[%c0_66, %c48_67] : memref<16x64xf32, #tpu.memory_space<vmem>>, vector<16x8xf32>
    tpu.vector_store %arg12[%c0_66, %c48_67], %128 {strides = array<i32>} : memref<16x64xf32, #tpu.memory_space<vmem>>, vector<16x8xf32>,
    %130 = vector.extract_strided_slice %10 {offsets = [0, 56], sizes = [16, 8], strides = [1, 1]} : vector<16x64xbf16> to vector<16x8xbf16>
    %c0_68 = arith.constant 0 : index
    %c56 = arith.constant 56 : index
    %131 = vector.load %arg10[%c0_68, %c56] : memref<16x64xbf16, #tpu.memory_space<vmem>>, vector<16x8xbf16>
    %c0_69 = arith.constant 0 : index
    %c56_70 = arith.constant 56 : index
    %132 = vector.load %arg11[%c0_69, %c56_70] : memref<16x64xbf16, #tpu.memory_space<vmem>>, vector<16x8xbf16>
    %cst_71 = arith.constant dense<0.000000e+00> : vector<16x16xf32>
    %133 = tpu.matmul %130, %131, %cst_71 {dimension_numbers = #tpu.dot_dimension_numbers<[1], [1], [0], [0], [0, 0, 1, 0], [], []>} : vector<16x8xbf16>, vector<16x8xbf16>, vector<16x16xf32> -> vector<16x16xf32>
    %cst_72 = arith.constant dense<0xFF800000> : vector<16xf32>
    %134 = vector.multi_reduction <maximumf>, %133, %cst_72 [1] : vector<16x16xf32> to vector<16xf32>
    %135 = vector.shape_cast %134 : vector<16xf32> to vector<16x1xf32>
    %136 = vector.broadcast %135 : vector<16x1xf32> to vector<16x16xf32>
    %137 = arith.subf %133, %136 : vector<16x16xf32>
    %138 = math.exp %137 : vector<16x16xf32>
    %cst_73 = arith.constant dense<0.000000e+00> : vector<16xf32>
    %139 = vector.multi_reduction <add>, %138, %cst_73 [1] : vector<16x16xf32> to vector<16xf32>
    %140 = vector.shape_cast %139 : vector<16xf32> to vector<16x1xf32>
    %141 = tpu.reciprocal %140 {approx = true} : vector<16x1xf32> -> vector<16x1xf32>
    %142 = vector.broadcast %141 : vector<16x1xf32> to vector<16x16xf32>
    %143 = arith.mulf %138, %142 : vector<16x16xf32>
    %144 = arith.truncf %143 : vector<16x16xf32> to vector<16x16xbf16>
    %cst_74 = arith.constant dense<0.000000e+00> : vector<16x8xf32>
    %145 = tpu.matmul %144, %132, %cst_74 {dimension_numbers = #tpu.dot_dimension_numbers<[1], [0], [0], [1], [0, 0, 1, 1], [], []>} : vector<16x16xbf16>, vector<16x8xbf16>, vector<16x8xf32> -> vector<16x8xf32>
    %c0_75 = arith.constant 0 : index
    %c56_76 = arith.constant 56 : index
    %146 = vector.load %arg12[%c0_75, %c56_76] : memref<16x64xf32, #tpu.memory_space<vmem>>, vector<16x8xf32>
    tpu.vector_store %arg12[%c0_75, %c56_76], %145 {strides = array<i32>} : memref<16x64xf32, #tpu.memory_space<vmem>>, vector<16x8xf32>,
    %c0_77 = arith.constant 0 : index
    %c0_78 = arith.constant 0 : index
    %147 = vector.load %arg7[%c0_77, %c0_78] : memref<1x64xf32, #tpu.memory_space<vmem>>, vector<1x64xf32>
    %c0_79 = arith.constant 0 : index
    %c0_80 = arith.constant 0 : index
    %148 = vector.load %arg12[%c0_79, %c0_80] : memref<16x64xf32, #tpu.memory_space<vmem>>, vector<16x64xf32>
    %149 = arith.truncf %148 : vector<16x64xf32> to vector<16x64xbf16>
    %c0_81 = arith.constant 0 : index
    %c0_82 = arith.constant 0 : index
    %150 = vector.load %arg5[%c0_81, %c0_82] : memref<64x64xbf16, #tpu.memory_space<vmem>>, vector<64x64xbf16>
    %cst_83 = arith.constant dense<0.000000e+00> : vector<16x64xf32>
    %151 = tpu.matmul %149, %150, %cst_83 {dimension_numbers = #tpu.dot_dimension_numbers<[1], [0], [0], [1], [0, 0, 1, 1], [], []>} : vector<16x64xbf16>, vector<64x64xbf16>, vector<16x64xf32> -> vector<16x64xf32>
    %c0_84 = arith.constant 0 : index
    %c0_85 = arith.constant 0 : index
    %152 = vector.load %arg6[%c0_84, %c0_85] : memref<64x64xbf16, #tpu.memory_space<vmem>>, vector<64x64xbf16>
    %cst_86 = arith.constant dense<0.000000e+00> : vector<16x64xf32>
    %153 = tpu.matmul %7, %152, %cst_86 {dimension_numbers = #tpu.dot_dimension_numbers<[1], [0], [0], [1], [0, 0, 1, 1], [], []>} : vector<16x64xbf16>, vector<64x64xbf16>, vector<16x64xf32> -> vector<16x64xf32>
    %154 = vector.broadcast %147 : vector<1x64xf32> to vector<16x64xf32>
    %155 = arith.addf %153, %154 : vector<16x64xf32>
    %c0_87 = arith.constant 0 : index
    %c0_88 = arith.constant 0 : index
    %c0_89 = arith.constant 0 : index
    %156 = vector.load %arg8[%c0_87, %c0_88, %c0_89] : memref<1x16x64xf32, #tpu.memory_space<vmem>>, vector<1x16x64xf32>
    %157 = vector.shape_cast %156 : vector<1x16x64xf32> to vector<16x64xf32>
    %158 = vector.shape_cast %155 : vector<16x64xf32> to vector<1x16x64xf32>
    tpu.vector_store %arg8[%c0_87, %c0_88, %c0_89], %158 {strides = array<i32>} : memref<1x16x64xf32, #tpu.memory_space<vmem>>, vector<1x16x64xf32>,
    %159 = vector.broadcast %147 : vector<1x64xf32> to vector<16x64xf32>
    %160 = arith.addf %151, %159 : vector<16x64xf32>
    %c0_90 = arith.constant 0 : index
    %c0_91 = arith.constant 0 : index
    %c0_92 = arith.constant 0 : index
    %161 = vector.load %arg9[%c0_90, %c0_91, %c0_92] : memref<1x16x64xf32, #tpu.memory_space<vmem>>, vector<1x16x64xf32>
    %162 = vector.shape_cast %161 : vector<1x16x64xf32> to vector<16x64xf32>
    %163 = vector.shape_cast %160 : vector<16x64xf32> to vector<1x16x64xf32>
    tpu.vector_store %arg9[%c0_90, %c0_91, %c0_92], %163 {strides = array<i32>} : memref<1x16x64xf32, #tpu.memory_space<vmem>>, vector<1x16x64xf32>,
    return
  }
  func.func @transform_0(%arg0: i32, %arg1: i32) -> (i32, i32, i32) {
    %c0_i32 = arith.constant 0 : i32
    %c0_i32_0 = arith.constant 0 : i32
    %c0_i32_1 = arith.constant 0 : i32
    return %arg0, %c0_i32, %c0_i32_0 : i32, i32, i32
  }
  func.func @transform_1(%arg0: i32, %arg1: i32) -> (i32, i32) {
    %c0_i32 = arith.constant 0 : i32
    %c0_i32_0 = arith.constant 0 : i32
    %c0_i32_1 = arith.constant 0 : i32
    return %c0_i32, %c0_i32_0 : i32, i32
  }
  func.func @transform_2(%arg0: i32, %arg1: i32) -> (i32, i32) {
    %c0_i32 = arith.constant 0 : i32
    %c0_i32_0 = arith.constant 0 : i32
    %c0_i32_1 = arith.constant 0 : i32
    return %c0_i32, %c0_i32_0 : i32, i32
  }
  func.func @transform_3(%arg0: i32, %arg1: i32) -> (i32, i32) {
    %c0_i32 = arith.constant 0 : i32
    %c0_i32_0 = arith.constant 0 : i32
    %c0_i32_1 = arith.constant 0 : i32
    return %c0_i32, %c0_i32_0 : i32, i32
  }
  func.func @transform_4(%arg0: i32, %arg1: i32) -> (i32, i32) {
    %c0_i32 = arith.constant 0 : i32
    %c0_i32_0 = arith.constant 0 : i32
    %c0_i32_1 = arith.constant 0 : i32
    return %c0_i32, %c0_i32_0 : i32, i32
  }
  func.func @transform_5(%arg0: i32, %arg1: i32) -> (i32, i32) {
    %c0_i32 = arith.constant 0 : i32
    %c0_i32_0 = arith.constant 0 : i32
    %c0_i32_1 = arith.constant 0 : i32
    return %c0_i32, %c0_i32_0 : i32, i32
  }
  func.func @transform_6(%arg0: i32, %arg1: i32) -> (i32, i32, i32) {
    %c0_i32 = arith.constant 0 : i32
    %c0_i32_0 = arith.constant 0 : i32
    return %arg0, %arg1, %c0_i32 : i32, i32, i32
  }
  func.func @transform_7(%arg0: i32, %arg1: i32) -> (i32, i32, i32) {
    %c0_i32 = arith.constant 0 : i32
    %c0_i32_0 = arith.constant 0 : i32
    return %arg0, %arg1, %c0_i32 : i32, i32, i32
  }
}

</mosaic_0001>

<llo_original>
// kernel: tpu_custom_call.1
$region0: #{tpu_custom_call.1}
  #allocation0 [shape = 'u32[]', space=smem, size = 0x4, offset = 0x4, fixed_abs, tag = 'smem constant byte address 0x4 - core index']
  #allocation1 [shape = 'u32[144,128]{1,0:T(1,128)}', space=vmem, size = 0x12000, scoped, tag = 'internal scratch']
  #allocation2 [shape = 'bf16[16,64]{1,0:T(8,128)(2,1)}', space=vmem, size = 0x1000, scoped, tag = 'scratch operand']
  #allocation3 [shape = 'bf16[16,64]{1,0:T(8,128)(2,1)}', space=vmem, size = 0x1000, scoped, tag = 'scratch operand']
  #allocation4 [shape = 'f32[16,64]{1,0:T(8,128)}', space=vmem, size = 0x2000, scoped, tag = 'scratch operand']
  %s0 = inlined_call_operand.hbm [shape: bf16[2,16,64], index: 0, kind: input, shape index: {}]
  %s1 = inlined_call_operand.hbm [shape: bf16[64,64], index: 1, kind: input, shape index: {}]
  %s2 = inlined_call_operand.hbm [shape: bf16[64,128], index: 2, kind: input, shape index: {}]
  %s3 = inlined_call_operand.hbm [shape: bf16[64,64], index: 3, kind: input, shape index: {}]
  %s4 = inlined_call_operand.hbm [shape: bf16[64,64], index: 4, kind: input, shape index: {}]
  %s5 = inlined_call_operand.vmem [shape: f32[1,64], index: 5, kind: input, shape index: {}]
  %s6 = inlined_call_operand.hbm [shape: f32[2,16,64], index: 6, kind: output, shape index: {0}]
  %s7 = inlined_call_operand.hbm [shape: f32[2,16,64], index: 7, kind: output, shape index: {1}]
  %8 = xla_tuple %s6, %s7
  %s9 = sld [smem:[#allocation0]]
  $region89: #{tpu_custom_call.1} parent=0
    _
  %s11 = ssub.s32 1, %s9
  %s12 = scalar_select 0, %s11, %s9
  $region1: #{tpu_custom_call.1} parent=0
    #allocation5 [shape = 'u8[8192]{0}', space=vmem, size = 0x2000, scoped, tag = 'input window, operand 0']
    #allocation6 [shape = 's32[2]{0}', space=sflag, size = 0x8, scoped, tag = 'scoped memory for tpu_custom_call.1']
    #allocation7 [shape = 's32[2]{0}', space=sflag, size = 0x8, scoped, tag = 'scoped memory for tpu_custom_call.1']
    #allocation8 [shape = 'u8[16384]{0}', space=vmem, size = 0x4000, scoped, tag = 'input window, operand 1, single buffered']
    #allocation9 [shape = 's32[1]{0}', space=sflag, size = 0x4, scoped, tag = 'scoped memory for tpu_custom_call.1']
    #allocation10 [shape = 'u8[16384]{0}', space=vmem, size = 0x4000, scoped, tag = 'input window, operand 2, single buffered']
    #allocation11 [shape = 'u8[16384]{0}', space=vmem, size = 0x4000, scoped, tag = 'input window, operand 3, single buffered']
    #allocation12 [shape = 's32[1]{0}', space=sflag, size = 0x4, scoped, tag = 'scoped memory for tpu_custom_call.1']
    #allocation13 [shape = 'u8[16384]{0}', space=vmem, size = 0x4000, scoped, tag = 'input window, operand 4, single buffered']
    #allocation14 [shape = 'u8[16384]{0}', space=vmem, size = 0x4000, scoped, tag = 'output window, operand 0']
    #allocation15 [shape = 'u8[16384]{0}', space=vmem, size = 0x4000, scoped, tag = 'output window, operand 1']
    #allocation16 [shape = 's32[2]{0}', space=sflag, size = 0x8, scoped, tag = 'scoped memory for tpu_custom_call.1']
    %13 = vsyncpa [#allocation6], 0
    %s14 = scalar_lea.sflag [#allocation6], 1
    %15 = vsyncpa %s14, 0
    %16 = vsyncpa [#allocation9], 0
    %17 = vsyncpa [#allocation12], 0
    %18 = vsyncpa [#allocation7], 0
    %s19 = scalar_lea.sflag [#allocation7], 1
    %20 = vsyncpa %s19, 0
    %21 = vsyncpa [#allocation16], 0
    %s22 = scalar_lea.sflag [#allocation16], 1
    %23 = vsyncpa %s22, 0
    loop: start=0, step=1, limit=4
    $region2: #{tpu_custom_call.1} parent=1 // loop_pre_header
      _
    $region3: #{tpu_custom_call.1} parent=1 // loop_header
      %s25 = sphi 0, %s29
      %p26 = scmp.ge.s32.totalorder %s25, 4
      %s32 = sphi 0, %s44
      %s33 = sphi 0, %s40
      %s34 = sphi 0, %s32
      %s35 = sphi 0, %s33
      %s36 = sphi 0, %s34
      %s37 = sphi 0, %s35
      %s47 = sphi 0, %s49
      %s50 = sphi 0, %s47
      %s51 = sphi 0, %s50
      %s67 = sphi 0, %s51
      %s71 = sphi 0, %s71
      %s73 = sphi 0, %s71
      %s74 = sphi 0, %s73
      %s88 = sphi 0, %s74
      %s92 = sphi 0, %s92
      %s94 = sphi 0, %s92
      %s95 = sphi 0, %s94
      %s109 = sphi 0, %s95
      %s113 = sphi 0, %s113
      %s115 = sphi 0, %s113
      %s116 = sphi 0, %s115
      %s130 = sphi 0, %s116
      %s134 = sphi 0, %s134
      %s136 = sphi 0, %s134
      %s137 = sphi 0, %s136
      %s151 = sphi 0, %s137
      %s155 = sphi 0, %s155
      %s157 = sphi 0, %s155
      %s158 = sphi 0, %s157
      %s172 = sphi 0, %s158
      %s180 = sphi 0, %s182
      %s183 = sphi 0, %s180
      %s184 = sphi 0, %s183
      %s200 = sphi 0, %s184
      %s208 = sphi 0, %s210
      %s211 = sphi 0, %s208
      %s212 = sphi 0, %s211
      %s228 = sphi 0, %s212
    $region4: #{tpu_custom_call.1} parent=1 // loop_header_branch
      %28 = sbr.rel (%p26) target = $region8
    $region5: #{tpu_custom_call.1} parent=1 // loop_body
      %s30 = ssub.s32 %s25, 1
      %s31 = ssub.s32 %s25, 2
      %s38 = sadd.s32 1, %s33
      %p39 = scmp.ge.s32.totalorder %s38, 1
      %s40 = scalar_select %p39, 0, %s38
      %s41 = sadd.s32 1, %s32
      %s42 = scalar_select %p39, %s41, %s32
      %p43 = scmp.ge.s32.totalorder %s42, 2
      %s44 = scalar_select %p43, 0, %s42
      %s45 = ssub.s32 %s32, %s44
      %p46 = scmp.eq.s32.totalorder %s45, 0
      %s48 = sadd.s32 %s47, 1
      %s49 = scalar_select %p46, %s47, %s48
      %p52 = pneg %p46
      %p53 = scmp.eq.s32.totalorder %s25, 1
      %p54 = por %p52, %p53
      %p55 = scmp.ne.s32.totalorder %s47, %s50
      %p56 = scmp.eq.s32.totalorder %s25, 0
      %p57 = por %p55, %p56
      %p58 = scmp.ne.s32.totalorder %s47, %s50
      %p59 = scmp.eq.s32.totalorder %s30, 1
      %p60 = por %p58, %p59
      %p61 = scmp.ne.s32.totalorder %s50, %s51
      %p62 = scmp.eq.s32.totalorder %s30, 0
      %p63 = por %p61, %p62
      %p64 = scmp.ne.s32.totalorder %s50, %s51
      %p65 = scmp.eq.s32.totalorder %s31, 1
      %p66 = por %p64, %p65
      %p68 = scmp.ne.s32.totalorder %s51, %s67
      %p69 = scmp.eq.s32.totalorder %s31, 0
      %p70 = por %p68, %p69
      %s72 = sadd.s32 %s71, 1
      %p75 = scmp.eq.s32.totalorder %s25, 1
      %p76 = scmp.ne.s32.totalorder %s71, %s73
      %p77 = scmp.eq.s32.totalorder %s25, 0
      %p78 = por %p76, %p77
      %p79 = scmp.ne.s32.totalorder %s71, %s73
      %p80 = scmp.eq.s32.totalorder %s30, 1
      %p81 = por %p79, %p80
      %p82 = scmp.ne.s32.totalorder %s73, %s74
      %p83 = scmp.eq.s32.totalorder %s30, 0
      %p84 = por %p82, %p83
      %p85 = scmp.ne.s32.totalorder %s73, %s74
      %p86 = scmp.eq.s32.totalorder %s31, 1
      %p87 = por %p85, %p86
      %p89 = scmp.ne.s32.totalorder %s74, %s88
      %p90 = scmp.eq.s32.totalorder %s31, 0
      %p91 = por %p89, %p90
      %s93 = sadd.s32 %s92, 1
      %p96 = scmp.eq.s32.totalorder %s25, 1
      %p97 = scmp.ne.s32.totalorder %s92, %s94
      %p98 = scmp.eq.s32.totalorder %s25, 0
      %p99 = por %p97, %p98
      %p100 = scmp.ne.s32.totalorder %s92, %s94
      %p101 = scmp.eq.s32.totalorder %s30, 1
      %p102 = por %p100, %p101
      %p103 = scmp.ne.s32.totalorder %s94, %s95
      %p104 = scmp.eq.s32.totalorder %s30, 0
      %p105 = por %p103, %p104
      %p106 = scmp.ne.s32.totalorder %s94, %s95
      %p107 = scmp.eq.s32.totalorder %s31, 1
      %p108 = por %p106, %p107
      %p110 = scmp.ne.s32.totalorder %s95, %s109
      %p111 = scmp.eq.s32.totalorder %s31, 0
      %p112 = por %p110, %p111
      %s114 = sadd.s32 %s113, 1
      %p117 = scmp.eq.s32.totalorder %s25, 1
      %p118 = scmp.ne.s32.totalorder %s113, %s115
      %p119 = scmp.eq.s32.totalorder %s25, 0
      %p120 = por %p118, %p119
      %p121 = scmp.ne.s32.totalorder %s113, %s115
      %p122 = scmp.eq.s32.totalorder %s30, 1
      %p123 = por %p121, %p122
      %p124 = scmp.ne.s32.totalorder %s115, %s116
      %p125 = scmp.eq.s32.totalorder %s30, 0
      %p126 = por %p124, %p125
      %p127 = scmp.ne.s32.totalorder %s115, %s116
      %p128 = scmp.eq.s32.totalorder %s31, 1
      %p129 = por %p127, %p128
      %p131 = scmp.ne.s32.totalorder %s116, %s130
      %p132 = scmp.eq.s32.totalorder %s31, 0
      %p133 = por %p131, %p132
      %s135 = sadd.s32 %s134, 1
      %p138 = scmp.eq.s32.totalorder %s25, 1
      %p139 = scmp.ne.s32.totalorder %s134, %s136
      %p140 = scmp.eq.s32.totalorder %s25, 0
      %p141 = por %p139, %p140
      %p142 = scmp.ne.s32.totalorder %s134, %s136
      %p143 = scmp.eq.s32.totalorder %s30, 1
      %p144 = por %p142, %p143
      %p145 = scmp.ne.s32.totalorder %s136, %s137
      %p146 = scmp.eq.s32.totalorder %s30, 0
      %p147 = por %p145, %p146
      %p148 = scmp.ne.s32.totalorder %s136, %s137
      %p149 = scmp.eq.s32.totalorder %s31, 1
      %p150 = por %p148, %p149
      %p152 = scmp.ne.s32.totalorder %s137, %s151
      %p153 = scmp.eq.s32.totalorder %s31, 0
      %p154 = por %p152, %p153
      %s156 = sadd.s32 %s155, 1
      %p159 = scmp.eq.s32.totalorder %s25, 1
      %p160 = scmp.ne.s32.totalorder %s155, %s157
      %p161 = scmp.eq.s32.totalorder %s25, 0
      %p162 = por %p160, %p161
      %p163 = scmp.ne.s32.totalorder %s155, %s157
      %p164 = scmp.eq.s32.totalorder %s30, 1
      %p165 = por %p163, %p164
      %p166 = scmp.ne.s32.totalorder %s157, %s158
      %p167 = scmp.eq.s32.totalorder %s30, 0
      %p168 = por %p166, %p167
      %p169 = scmp.ne.s32.totalorder %s157, %s158
      %p170 = scmp.eq.s32.totalorder %s31, 1
      %p171 = por %p169, %p170
      %p173 = scmp.ne.s32.totalorder %s158, %s172
      %p174 = scmp.eq.s32.totalorder %s31, 0
      %p175 = por %p173, %p174
      %s176 = ssub.s32 %s32, %s44
      %s177 = ssub.s32 %s33, %s40
      %s178 = sor.u32 %s176, %s177
      %p179 = scmp.eq.s32.totalorder %s178, 0
      %s181 = sadd.s32 %s180, 1
      %s182 = scalar_select %p179, %s180, %s181
      %p185 = pneg %p179
      %p186 = scmp.eq.s32.totalorder %s25, 1
      %p187 = por %p185, %p186
      %p188 = scmp.ne.s32.totalorder %s180, %s183
      %p189 = scmp.eq.s32.totalorder %s25, 0
      %p190 = por %p188, %p189
      %p191 = scmp.ne.s32.totalorder %s180, %s183
      %p192 = scmp.eq.s32.totalorder %s30, 1
      %p193 = por %p191, %p192
      %p194 = scmp.ne.s32.totalorder %s183, %s184
      %p195 = scmp.eq.s32.totalorder %s30, 0
      %p196 = por %p194, %p195
      %p197 = scmp.ne.s32.totalorder %s183, %s184
      %p198 = scmp.eq.s32.totalorder %s31, 1
      %p199 = por %p197, %p198
      %p201 = scmp.ne.s32.totalorder %s184, %s200
      %p202 = scmp.eq.s32.totalorder %s31, 0
      %p203 = por %p201, %p202
      %s204 = ssub.s32 %s32, %s44
      %s205 = ssub.s32 %s33, %s40
      %s206 = sor.u32 %s204, %s205
      %p207 = scmp.eq.s32.totalorder %s206, 0
      %s209 = sadd.s32 %s208, 1
      %s210 = scalar_select %p207, %s208, %s209
      %p213 = pneg %p207
      %p214 = scmp.eq.s32.totalorder %s25, 1
      %p215 = por %p213, %p214
      %p216 = scmp.ne.s32.totalorder %s208, %s211
      %p217 = scmp.eq.s32.totalorder %s25, 0
      %p218 = por %p216, %p217
      %p219 = scmp.ne.s32.totalorder %s208, %s211
      %p220 = scmp.eq.s32.totalorder %s30, 1
      %p221 = por %p219, %p220
      %p222 = scmp.ne.s32.totalorder %s211, %s212
      %p223 = scmp.eq.s32.totalorder %s30, 0
      %p224 = por %p222, %p223
      %p225 = scmp.ne.s32.totalorder %s211, %s212
      %p226 = scmp.eq.s32.totalorder %s31, 1
      %p227 = por %p225, %p226
      %p229 = scmp.ne.s32.totalorder %s212, %s228
      %p230 = scmp.eq.s32.totalorder %s31, 0
      %p231 = por %p229, %p230
      %p232 = scmp.le.s32.totalorder 1, %s25
      %p233 = scmp.lt.s32.totalorder %s25, 3
      %p234 = pnand %p232, %p233
      %p235 = pneg %p234
      // Predicated region
      $region9: #{tpu_custom_call.1} parent=5 // pred_check
        _
      $region10: #{tpu_custom_call.1} parent=5 // pred_check_branch
        %237 = sbr.rel (%p234) target = $region12
      $region11: #{tpu_custom_call.1} parent=5 // pred_region
        %s238 = ssub.s32 %s25, 1
        // Predicated region
        $region13: #{tpu_custom_call.1} parent=11 // pred_check
          %p239 = pneg %p84
        $region14: #{tpu_custom_call.1} parent=11 // pred_check_branch
          %241 = sbr.rel (%p239) target = $region16
        $region15: #{tpu_custom_call.1} parent=11 // pred_region
          %s243 = ssub.s32 512, 512
          %244 = vsyncadd [#allocation9], %s243
          %s245 = sshll.u32 [#allocation8], 4
          %s246 = int_to_ptr.vmem [resolvable:$true] %s245
          %251 = dma.hbm_to_vmem [thread:$0]  %s1, 512, %s246, [#allocation9], 64, 64, 4
        $region16: #{tpu_custom_call.1} parent=11 // pred_fallthru
          _
        // Predicated region
        $region17: #{tpu_custom_call.1} parent=11 // pred_check
          %p252 = pneg %p105
        $region18: #{tpu_custom_call.1} parent=11 // pred_check_branch
          %254 = sbr.rel (%p252) target = $region20
        $region19: #{tpu_custom_call.1} parent=11 // pred_region
          %s256 = ssub.s32 512, 512
          %257 = vsyncadd [#allocation9], %s256
          %s258 = sshll.u32 [#allocation10], 4
          %s259 = int_to_ptr.vmem [resolvable:$true] %s258
          %264 = dma.hbm_to_vmem [thread:$0]  %s2, 512, %s259, [#allocation9], 64, 64, 4
        $region20: #{tpu_custom_call.1} parent=11 // pred_fallthru
          _
        // Predicated region
        $region21: #{tpu_custom_call.1} parent=11 // pred_check
          %p265 = pneg %p126
        $region22: #{tpu_custom_call.1} parent=11 // pred_check_branch
          %267 = sbr.rel (%p265) target = $region24
        $region23: #{tpu_custom_call.1} parent=11 // pred_region
          %s269 = ssub.s32 512, 512
          %270 = vsyncadd [#allocation12], %s269
          %s271 = sshll.u32 [#allocation11], 4
          %s272 = int_to_ptr.vmem [resolvable:$true] %s271
          %277 = dma.hbm_to_vmem [thread:$0]  %s3, 512, %s272, [#allocation12], 64, 64, 4
        $region24: #{tpu_custom_call.1} parent=11 // pred_fallthru
          _
        // Predicated region
        $region25: #{tpu_custom_call.1} parent=11 // pred_check
          %p278 = pneg %p147
        $region26: #{tpu_custom_call.1} parent=11 // pred_check_branch
          %280 = sbr.rel (%p278) target = $region28
        $region27: #{tpu_custom_call.1} parent=11 // pred_region
          %s282 = ssub.s32 512, 512
          %283 = vsyncadd [#allocation12], %s282
          %s284 = sshll.u32 [#allocation13], 4
          %s285 = int_to_ptr.vmem [resolvable:$true] %s284
          %290 = dma.hbm_to_vmem [thread:$0]  %s4, 512, %s285, [#allocation12], 64, 64, 4
        $region28: #{tpu_custom_call.1} parent=11 // pred_fallthru
          _
        // Predicated region
        $region29: #{tpu_custom_call.1} parent=11 // pred_check
          %p291 = pneg %p168
        $region30: #{tpu_custom_call.1} parent=11 // pred_check_branch
          %293 = sbr.rel (%p291) target = $region32
        $region31: #{tpu_custom_call.1} parent=11 // pred_region
          _
        $region32: #{tpu_custom_call.1} parent=11 // pred_fallthru
          _
      $region12: #{tpu_custom_call.1} parent=5 // pred_fallthru
        _
      %p294 = scmp.lt.s32.totalorder %s25, 2
      // Predicated region
      $region33: #{tpu_custom_call.1} parent=5 // pred_check
        %p295 = pneg %p294
      $region34: #{tpu_custom_call.1} parent=5 // pred_check_branch
        %297 = sbr.rel (%p295) target = $region36
      $region35: #{tpu_custom_call.1} parent=5 // pred_region
        // Predicated region
        $region37: #{tpu_custom_call.1} parent=35 // pred_check
          %p298 = pneg %p57
        $region38: #{tpu_custom_call.1} parent=35 // pred_check_branch
          %300 = sbr.rel (%p298) target = $region40
        $region39: #{tpu_custom_call.1} parent=35 // pred_region
          %s301 = sand.u32 %s47, 1
          %s302 = scalar_lea.sflag [#allocation6], %s301
          %s303 = sand.u32 %s47, 1
          %s304 = smul.addr %s303, 8
          %s305 = scalar_lea.vmem [#allocation5], %s304
          %s307 = ssub.s32 128, 128
          %308 = vsyncadd %s302, %s307
          %s309 = smul.addr %s32, 2
          %s310 = smul.addr %s309, 64
          %s311 = scalar_lea.hbm %s0, %s310
          %s312 = sshll.u32 %s305, 4
          %s313 = int_to_ptr.vmem [resolvable:$true] %s312
          %318 = dma.hbm_to_vmem [thread:$0]  %s311, 128, %s313, %s302, 64, 64, 4
        $region40: #{tpu_custom_call.1} parent=35 // pred_fallthru
          _
      $region36: #{tpu_custom_call.1} parent=5 // pred_fallthru
        _
      %p319 = scmp.le.s32.totalorder 1, %s25
      %p320 = scmp.lt.s32.totalorder %s25, 3
      %p321 = pnand %p319, %p320
      %p322 = pneg %p321
      // Predicated region
      $region41: #{tpu_custom_call.1} parent=5 // pred_check
        _
      $region42: #{tpu_custom_call.1} parent=5 // pred_check_branch
        %324 = sbr.rel (%p321) target = $region44
      $region43: #{tpu_custom_call.1} parent=5 // pred_region
        %s325 = ssub.s32 %s25, 1
        %s326 = sand.u32 %s50, 1
        %s327 = scalar_lea.sflag [#allocation6], %s326
        %s328 = sand.u32 %s50, 1
        %s329 = smul.addr %s328, 8
        %s330 = scalar_lea.vmem [#allocation5], %s329
        // Predicated region
        $region45: #{tpu_custom_call.1} parent=43 // pred_check
          %p331 = pneg %p63
        $region46: #{tpu_custom_call.1} parent=43 // pred_check_branch
          %333 = sbr.rel (%p331) target = $region48
        $region47: #{tpu_custom_call.1} parent=43 // pred_region
          %334 = dma.done %s327, 128
        $region48: #{tpu_custom_call.1} parent=43 // pred_fallthru
          _
        // Predicated region
        $region49: #{tpu_custom_call.1} parent=43 // pred_check
          %p335 = pneg %p84
        $region50: #{tpu_custom_call.1} parent=43 // pred_check_branch
          %337 = sbr.rel (%p335) target = $region52
        $region51: #{tpu_custom_call.1} parent=43 // pred_region
          %338 = dma.done [#allocation9], 512
        $region52: #{tpu_custom_call.1} parent=43 // pred_fallthru
          _
        // Predicated region
        $region53: #{tpu_custom_call.1} parent=43 // pred_check
          %p339 = pneg %p105
        $region54: #{tpu_custom_call.1} parent=43 // pred_check_branch
          %341 = sbr.rel (%p339) target = $region56
        $region55: #{tpu_custom_call.1} parent=43 // pred_region
          %342 = dma.done [#allocation9], 512
        $region56: #{tpu_custom_call.1} parent=43 // pred_fallthru
          _
        // Predicated region
        $region57: #{tpu_custom_call.1} parent=43 // pred_check
          %p343 = pneg %p126
        $region58: #{tpu_custom_call.1} parent=43 // pred_check_branch
          %345 = sbr.rel (%p343) target = $region60
        $region59: #{tpu_custom_call.1} parent=43 // pred_region
          %346 = dma.done [#allocation12], 512
        $region60: #{tpu_custom_call.1} parent=43 // pred_fallthru
          _
        // Predicated region
        $region61: #{tpu_custom_call.1} parent=43 // pred_check
          %p347 = pneg %p147
        $region62: #{tpu_custom_call.1} parent=43 // pred_check_branch
          %349 = sbr.rel (%p347) target = $region64
        $region63: #{tpu_custom_call.1} parent=43 // pred_region
          %350 = dma.done [#allocation12], 512
        $region64: #{tpu_custom_call.1} parent=43 // pred_fallthru
          _
        %s351 = sand.u32 %s50, 1
        %s352 = scalar_lea.sflag [#allocation6], %s351
        %s353 = sand.u32 %s50, 1
        %s354 = smul.addr %s353, 8
        %s355 = scalar_lea.vmem [#allocation5], %s354
        %p356 = pneg %p63
        %p357 = pneg %p60
        %p358 = pneg %p84
        %p359 = pneg %p81
        %p360 = pneg %p105
        %p361 = pneg %p102
        %p362 = pneg %p126
        %p363 = pneg %p123
        %p364 = pneg %p147
        %p365 = pneg %p144
        %p366 = pneg %p168
        %p367 = pneg %p165
        %p368 = pneg %p196
        %p369 = pneg %p193
        %s370 = sand.u32 %s183, 1
        %s371 = scalar_lea.sflag [#allocation7], %s370
        %s372 = sand.u32 %s183, 1
        %s373 = smul.addr %s372, 16
        %s374 = scalar_lea.vmem [#allocation14], %s373
        %p375 = pneg %p224
        %p376 = pneg %p221
        %s377 = sand.u32 %s211, 1
        %s378 = scalar_lea.sflag [#allocation16], %s377
        %s379 = sand.u32 %s211, 1
        %s380 = smul.addr %s379, 16
        %s381 = scalar_lea.vmem [#allocation15], %s380
        %s382 = smul.u32 2, %s35
        %s383 = smul.u32 2, %s35
        %p385 = scmp.eq.s32.totalorder %s35, 0
        // Predicated region
        $region65: #{tpu_custom_call.1} parent=43 // pred_check
          %p386 = pneg %p385
        $region66: #{tpu_custom_call.1} parent=43 // pred_check_branch
          %388 = sbr.rel (%p386) target = $region68
        $region67: #{tpu_custom_call.1} parent=43 // pred_region
          %v389 = vld [vmem:[%s330] sm:$0xf]
          %v390 = vld [vmem:[%s330 + $0x4] sm:$0xf]
          %v391 = vld [vmem:[#allocation10] sm:$0xf]
          %v392 = vld [vmem:[#allocation10 + $0x4] sm:$0xf]
          %v393 = vld [vmem:[#allocation10 + $0x8] sm:$0xf]
          %v394 = vld [vmem:[#allocation10 + $0xc] sm:$0xf]
          %v395 = vld [vmem:[#allocation10 + $0x10] sm:$0xf]
          %v396 = vld [vmem:[#allocation10 + $0x14] sm:$0xf]
          %v397 = vld [vmem:[#allocation10 + $0x18] sm:$0xf]
          %v398 = vld [vmem:[#allocation10 + $0x1c] sm:$0xf]
          %v401 = vunpack.c.l.b16 %v389
          %v402 = vunpack.c.l.b16 %v390
          %v403 = vpack.c.b16 %v402, %v401
          %v412 = vunpack.c.l.b16 %v391
          %v413 = vunpack.c.l.b16 %v392
          %v414 = vunpack.c.l.b16 %v393
          %v415 = vunpack.c.l.b16 %v394
          %v416 = vunpack.c.l.b16 %v395
          %v417 = vunpack.c.l.b16 %v396
          %v418 = vunpack.c.l.b16 %v397
          %v419 = vunpack.c.l.b16 %v398
          %v420 = vpack.c.b16 %v413, %v412
          %v421 = vpack.c.b16 %v415, %v414
          %v422 = vpack.c.b16 %v417, %v416
          %v423 = vpack.c.b16 %v419, %v418
          %vm428 = vcmask 523264
          %v430 = vsel %vm428, %v403, 0
          %432 = vmatprep.subr.bf16.mxu0 0
          %433 = vmatpush1.bf16.msra.mxu0 0
          %434 = vmatprep.subr.bf16.mxu0 0
          %435 = vmatpush1.bf16.msra.mxu0 0
          %436 = vmatprep.subr.bf16.mxu0 0
          %437 = vmatpush1.bf16.msra.mxu0 0
          %438 = vmatprep.subr.bf16.mxu0 0
          %439 = vmatpush1.bf16.msra.mxu0 0
          %440 = vmatprep.subr.bf16.mxu0 0
          %441 = vmatpush1.bf16.msra.mxu0 %v423
          %442 = vmatprep.subr.bf16.mxu0 0
          %443 = vmatpush1.bf16.msra.mxu0 %v422
          %444 = vmatprep.subr.bf16.mxu0 0
          %445 = vmatpush1.bf16.msra.mxu0 %v421
          %446 = vmatprep.subr.bf16.mxu0 0
          %447 = vmatpush1.bf16.msra.mxu0 %v420
          %448 = vmatprep.subr.bf16.mxu0 0
          %449 = vmatpush2.bf16.msra.mxu0 0
          %450 = vmatprep.subr.bf16.mxu0 0
          %451 = vmatpush2.bf16.msra.mxu0 0
          %452 = vmatprep.subr.bf16.mxu0 0
          %453 = vmatpush2.bf16.msra.mxu0 0
          %454 = vmatprep.subr.bf16.mxu0 0
          %455 = vmatpush2.bf16.msra.mxu0 0
          %456 = vmatprep.subr.bf16.mxu0 0
          %457 = vmatpush2.bf16.msra.mxu0 0
          %458 = vmatprep.subr.bf16.mxu0 0
          %459 = vmatpush2.bf16.msra.mxu0 0
          %460 = vmatprep.subr.bf16.mxu0 0
          %461 = vmatpush2.bf16.msra.mxu0 0
          %462 = vmatprep.subr.bf16.mxu0 0
          %463 = vmatpush2.bf16.msra.mxu0 0
          %464 = vmatprep.mubr.bf16.mxu0 0
          %465 = vmatmul.mubr.bf16.gmra.mxu0 %v430
          %v466 = vpop.f32.mrf.mxu0
          %v467 = vadd.f32 0.0, %v466
          %v468 = vpop.f32.mrf.mxu0
          %v469 = vpop.f32.mrf.mxu0
          %v470 = vadd.f32 0.0, %v469
          %v471 = vpop.f32.mrf.mxu0
          %472 = vdwg.mxu0
          %v473 = vpack.c.bf16 %v470, %v467
          %v475 = vunpack.c.l.b16 %v473
          %v476 = vunpack.c.h.b16 %v473
          %v477 = vpack.c.b16 %v475, %v475
          %v478 = vpack.c.b16 %v476, %v476
          %vm481 = vcmask 519168
          %482 = vst.msk [vmem:[#allocation2] sm:$0xf] %vm481, %v477
          %483 = vst.msk [vmem:[#allocation2 + $0x4] sm:$0xf] %vm481, %v478
          %484 = vrot.lane.b32.xlu0 %v477, 64
          %v485 = vpop.permute.xlu0 %484
          %486 = vrot.lane.b32.xlu0 %v478, 64
          %v487 = vpop.permute.xlu0 %486
          %490 = vst.msk [vmem:[#allocation3] sm:$0xf] %vm481, %v485
          %491 = vst.msk [vmem:[#allocation3 + $0x4] sm:$0xf] %vm481, %v487
        $region68: #{tpu_custom_call.1} parent=43 // pred_fallthru
          _
        %s492 = smul.u32 %s35, 16
        %s493 = sshra.s32 %s492, 3
        %s494 = sand.u32 %s492, 7
        %s495 = smul.addr %s493, 4
        %s496 = scalar_lea.vmem %s330, %s495 [#allocation5]
        %v497 = vld [vmem:[%s496] sm:$0xf]
        %v498 = vld [vmem:[%s496 + $0x4] sm:$0xf]
        %v499 = vld [vmem:[#allocation8] sm:$0xf]
        %v500 = vld [vmem:[#allocation8 + $0x4] sm:$0xf]
        %v501 = vld [vmem:[#allocation8 + $0x8] sm:$0xf]
        %v502 = vld [vmem:[#allocation8 + $0xc] sm:$0xf]
        %v503 = vld [vmem:[#allocation8 + $0x10] sm:$0xf]
        %v504 = vld [vmem:[#allocation8 + $0x14] sm:$0xf]
        %v505 = vld [vmem:[#allocation8 + $0x18] sm:$0xf]
        %v506 = vld [vmem:[#allocation8 + $0x1c] sm:$0xf]
        %v509 = vunpack.c.l.b16 %v497
        %v510 = vunpack.c.l.b16 %v498
        %v511 = vpack.c.b16 %v510, %v509
        %v520 = vunpack.c.l.b16 %v499
        %v521 = vunpack.c.l.b16 %v500
        %v522 = vunpack.c.l.b16 %v501
        %v523 = vunpack.c.l.b16 %v502
        %v524 = vunpack.c.l.b16 %v503
        %v525 = vunpack.c.l.b16 %v504
        %v526 = vunpack.c.l.b16 %v505
        %v527 = vunpack.c.l.b16 %v506
        %v528 = vpack.c.b16 %v521, %v520
        %v529 = vpack.c.b16 %v523, %v522
        %v530 = vpack.c.b16 %v525, %v524
        %v531 = vpack.c.b16 %v527, %v526
        %vm536 = vcmask 523264
        %v538 = vsel %vm536, %v511, 0
        %540 = vmatprep.subr.bf16.mxu0 0
        %541 = vmatpush1.bf16.msra.mxu0 0
        %542 = vmatprep.subr.bf16.mxu0 0
        %543 = vmatpush1.bf16.msra.mxu0 0
        %544 = vmatprep.subr.bf16.mxu0 0
        %545 = vmatpush1.bf16.msra.mxu0 0
        %546 = vmatprep.subr.bf16.mxu0 0
        %547 = vmatpush1.bf16.msra.mxu0 0
        %548 = vmatprep.subr.bf16.mxu0 0
        %549 = vmatpush1.bf16.msra.mxu0 %v531
        %550 = vmatprep.subr.bf16.mxu0 0
        %551 = vmatpush1.bf16.msra.mxu0 %v530
        %552 = vmatprep.subr.bf16.mxu0 0
        %553 = vmatpush1.bf16.msra.mxu0 %v529
        %554 = vmatprep.subr.bf16.mxu0 0
        %555 = vmatpush1.bf16.msra.mxu0 %v528
        %556 = vmatprep.subr.bf16.mxu0 0
        %557 = vmatpush2.bf16.msra.mxu0 0
        %558 = vmatprep.subr.bf16.mxu0 0
        %559 = vmatpush2.bf16.msra.mxu0 0
        %560 = vmatprep.subr.bf16.mxu0 0
        %561 = vmatpush2.bf16.msra.mxu0 0
        %562 = vmatprep.subr.bf16.mxu0 0
        %563 = vmatpush2.bf16.msra.mxu0 0
        %564 = vmatprep.subr.bf16.mxu0 0
        %565 = vmatpush2.bf16.msra.mxu0 0
        %566 = vmatprep.subr.bf16.mxu0 0
        %567 = vmatpush2.bf16.msra.mxu0 0
        %568 = vmatprep.subr.bf16.mxu0 0
        %569 = vmatpush2.bf16.msra.mxu0 0
        %570 = vmatprep.subr.bf16.mxu0 0
        %571 = vmatpush2.bf16.msra.mxu0 0
        %572 = vmatprep.mubr.bf16.mxu0 0
        %573 = vmatmul.mubr.bf16.gmra.mxu0 %v538
        %v574 = vpop.f32.mrf.mxu0
        %v575 = vadd.f32 0.0, %v574
        %v576 = vpop.f32.mrf.mxu0
        %v577 = vpop.f32.mrf.mxu0
        %v578 = vadd.f32 0.0, %v577
        %v579 = vpop.f32.mrf.mxu0
        %580 = vdwg.mxu0
        %v581 = vpack.c.bf16 %v578, %v575
        %v582 = vld [vmem:[#allocation2] sm:$0xf]
        %v583 = vld [vmem:[#allocation2 + $0x4] sm:$0xf]
        %v584 = vld [vmem:[#allocation3] sm:$0xf]
        %v585 = vld [vmem:[#allocation3 + $0x4] sm:$0xf]
        %v588 = vunpack.c.l.b16 %v582
        %v589 = vunpack.c.l.b16 %v583
        %v590 = vpack.c.b16 %v589, %v588
        %vm591 = vcmask 64512
        %v593 = vsel %vm591, %v581, 0
        %v596 = vsel %vm591, %v590, 0
        %598 = vmatprep.subr.bf16.mxu0 0
        %599 = vmatpush1.bf16.xpose.msra.mxu0 0
        %600 = vmatprep.subr.bf16.mxu0 0
        %601 = vmatpush1.bf16.xpose.msra.mxu0 0
        %602 = vmatprep.subr.bf16.mxu0 0
        %603 = vmatpush1.bf16.xpose.msra.mxu0 0
        %604 = vmatprep.subr.bf16.mxu0 0
        %605 = vmatpush1.bf16.xpose.msra.mxu0 0
        %606 = vmatprep.subr.bf16.mxu0 0
        %607 = vmatpush1.bf16.xpose.msra.mxu0 0
        %608 = vmatprep.subr.bf16.mxu0 0
        %609 = vmatpush1.bf16.xpose.msra.mxu0 0
        %610 = vmatprep.subr.bf16.mxu0 0
        %611 = vmatpush1.bf16.xpose.msra.mxu0 0
        %612 = vmatprep.subr.bf16.mxu0 0
        %613 = vmatpush1.bf16.xpose.msra.mxu0 %v596
        %614 = vmatprep.subr.bf16.mxu0 0
        %615 = vmatpush2.bf16.xpose.msra.mxu0 0
        %616 = vmatprep.subr.bf16.mxu0 0
        %617 = vmatpush2.bf16.xpose.msra.mxu0 0
        %618 = vmatprep.subr.bf16.mxu0 0
        %619 = vmatpush2.bf16.xpose.msra.mxu0 0
        %620 = vmatprep.subr.bf16.mxu0 0
        %621 = vmatpush2.bf16.xpose.msra.mxu0 0
        %622 = vmatprep.subr.bf16.mxu0 0
        %623 = vmatpush2.bf16.xpose.msra.mxu0 0
        %624 = vmatprep.subr.bf16.mxu0 0
        %625 = vmatpush2.bf16.xpose.msra.mxu0 0
        %626 = vmatprep.subr.bf16.mxu0 0
        %627 = vmatpush2.bf16.xpose.msra.mxu0 0
        %628 = vmatprep.subr.bf16.mxu0 0
        %629 = vmatpush2.bf16.xpose.msra.mxu0 0
        %630 = vmatprep.mubr.bf16.mxu0 0
        %631 = vmatmul.mubr.bf16.gmra.mxu0 %v593
        %v632 = vpop.f32.mrf.mxu0
        %v633 = vadd.f32 0.0, %v632
        %v634 = vpop.f32.mrf.mxu0
        %v635 = vpop.f32.mrf.mxu0
        %v636 = vadd.f32 0.0, %v635
        %v637 = vpop.f32.mrf.mxu0
        %638 = vdwg.mxu0
        %vm639 = vcmask 130048
        %v640 = vsel %vm639, %v633, -inf
        %641 = vmax.xlane.f32.xlu0 %v640
        %v642 = vpop.xlane.xlu0 %641
        %v643 = vsel %vm639, %v636, -inf
        %644 = vmax.xlane.f32.xlu0 %v643
        %v645 = vpop.xlane.xlu0 %644
        %v646 = vsub.f32 %v633, %v642
        %v647 = vsub.f32 %v636, %v645
        %v648 = vmul.f32 %v646, 1.442695
        %v649 = vpow.pop %v648
        %v650 = vmul.f32 %v647, 1.442695
        %v651 = vpow.pop %v650
        %v652 = vsel %vm639, %v649, 0.0
        %653 = vadd.xlane.f32.xlu0 %v652
        %v654 = vpop.xlane.xlu0 %653
        %v655 = vsel %vm639, %v651, 0.0
        %656 = vadd.xlane.f32.xlu0 %v655
        %v657 = vpop.xlane.xlu0 %656
        %v658 = vrcp.pop %v654
        %v659 = vrcp.pop %v657
        %v660 = vmul.f32 %v649, %v658
        %v661 = vmul.f32 %v651, %v659
        %v662 = vpack.c.bf16 %v661, %v660
        %v665 = vunpack.c.l.b16 %v584
        %v666 = vunpack.c.l.b16 %v585
        %v667 = vpack.c.b16 %v666, %v665
        %v670 = vsel %vm639, %v662, 0
        %672 = vmatprep.subr.bf16.mxu0 0
        %673 = vmatpush1.bf16.msra.mxu0 0
        %674 = vmatprep.subr.bf16.mxu0 0
        %675 = vmatpush1.bf16.msra.mxu0 0
        %676 = vmatprep.subr.bf16.mxu0 0
        %677 = vmatpush1.bf16.msra.mxu0 0
        %678 = vmatprep.subr.bf16.mxu0 0
        %679 = vmatpush1.bf16.msra.mxu0 0
        %680 = vmatprep.subr.bf16.mxu0 0
        %681 = vmatpush1.bf16.msra.mxu0 0
        %682 = vmatprep.subr.bf16.mxu0 0
        %683 = vmatpush1.bf16.msra.mxu0 0
        %684 = vmatprep.subr.bf16.mxu0 0
        %685 = vmatpush1.bf16.msra.mxu0 0
        %686 = vmatprep.subr.bf16.mxu0 0
        %687 = vmatpush1.bf16.msra.mxu0 %v667
        %688 = vmatprep.subr.bf16.mxu0 0
        %689 = vmatpush2.bf16.msra.mxu0 0
        %690 = vmatprep.subr.bf16.mxu0 0
        %691 = vmatpush2.bf16.msra.mxu0 0
        %692 = vmatprep.subr.bf16.mxu0 0
        %693 = vmatpush2.bf16.msra.mxu0 0
        %694 = vmatprep.subr.bf16.mxu0 0
        %695 = vmatpush2.bf16.msra.mxu0 0
        %696 = vmatprep.subr.bf16.mxu0 0
        %697 = vmatpush2.bf16.msra.mxu0 0
        %698 = vmatprep.subr.bf16.mxu0 0
        %699 = vmatpush2.bf16.msra.mxu0 0
        %700 = vmatprep.subr.bf16.mxu0 0
        %701 = vmatpush2.bf16.msra.mxu0 0
        %702 = vmatprep.subr.bf16.mxu0 0
        %703 = vmatpush2.bf16.msra.mxu0 0
        %704 = vmatprep.mubr.bf16.mxu0 0
        %705 = vmatmul.mubr.bf16.gmra.mxu0 %v670
        %v706 = vpop.f32.mrf.mxu0
        %v707 = vadd.f32 0.0, %v706
        %v708 = vpop.f32.mrf.mxu0
        %v709 = vpop.f32.mrf.mxu0
        %v710 = vadd.f32 0.0, %v709
        %v711 = vpop.f32.mrf.mxu0
        %712 = vdwg.mxu0
        %713 = vst.msk [vmem:[#allocation4] sm:$0xff] %vm591, %v707
        %714 = vst.msk [vmem:[#allocation4 + $0x8] sm:$0xff] %vm591, %v710
        %v715 = vld [vmem:[#allocation2] sm:$0xf]
        %v716 = vld [vmem:[#allocation2 + $0x4] sm:$0xf]
        %v717 = vld [vmem:[#allocation3] sm:$0xf]
        %v718 = vld [vmem:[#allocation3 + $0x4] sm:$0xf]
        %720 = vrot.lane.b32.xlu0 %v581, 120
        %v721 = vpop.permute.xlu0 %720
        %v724 = vunpack.c.l.b16 %v715
        %v725 = vunpack.c.l.b16 %v716
        %v726 = vpack.c.b16 %v725, %v724
        %727 = vrot.lane.b32.xlu0 %v726, 120
        %v728 = vpop.permute.xlu0 %727
        %v730 = vsel %vm591, %v721, 0
        %v733 = vsel %vm591, %v728, 0
        %735 = vmatprep.subr.bf16.mxu0 0
        %736 = vmatpush1.bf16.xpose.msra.mxu0 0
        %737 = vmatprep.subr.bf16.mxu0 0
        %738 = vmatpush1.bf16.xpose.msra.mxu0 0
        %739 = vmatprep.subr.bf16.mxu0 0
        %740 = vmatpush1.bf16.xpose.msra.mxu0 0
        %741 = vmatprep.subr.bf16.mxu0 0
        %742 = vmatpush1.bf16.xpose.msra.mxu0 0
        %743 = vmatprep.subr.bf16.mxu0 0
        %744 = vmatpush1.bf16.xpose.msra.mxu0 0
        %745 = vmatprep.subr.bf16.mxu0 0
        %746 = vmatpush1.bf16.xpose.msra.mxu0 0
        %747 = vmatprep.subr.bf16.mxu0 0
        %748 = vmatpush1.bf16.xpose.msra.mxu0 0
        %749 = vmatprep.subr.bf16.mxu0 0
        %750 = vmatpush1.bf16.xpose.msra.mxu0 %v733
        %751 = vmatprep.subr.bf16.mxu0 0
        %752 = vmatpush2.bf16.xpose.msra.mxu0 0
        %753 = vmatprep.subr.bf16.mxu0 0
        %754 = vmatpush2.bf16.xpose.msra.mxu0 0
        %755 = vmatprep.subr.bf16.mxu0 0
        %756 = vmatpush2.bf16.xpose.msra.mxu0 0
        %757 = vmatprep.subr.bf16.mxu0 0
        %758 = vmatpush2.bf16.xpose.msra.mxu0 0
        %759 = vmatprep.subr.bf16.mxu0 0
        %760 = vmatpush2.bf16.xpose.msra.mxu0 0
        %761 = vmatprep.subr.bf16.mxu0 0
        %762 = vmatpush2.bf16.xpose.msra.mxu0 0
        %763 = vmatprep.subr.bf16.mxu0 0
        %764 = vmatpush2.bf16.xpose.msra.mxu0 0
        %765 = vmatprep.subr.bf16.mxu0 0
        %766 = vmatpush2.bf16.xpose.msra.mxu0 0
        %767 = vmatprep.mubr.bf16.mxu0 0
        %768 = vmatmul.mubr.bf16.gmra.mxu0 %v730
        %v769 = vpop.f32.mrf.mxu0
        %v770 = vadd.f32 0.0, %v769
        %v771 = vpop.f32.mrf.mxu0
        %v772 = vpop.f32.mrf.mxu0
        %v773 = vadd.f32 0.0, %v772
        %v774 = vpop.f32.mrf.mxu0
        %775 = vdwg.mxu0
        %v776 = vsel %vm639, %v770, -inf
        %777 = vmax.xlane.f32.xlu0 %v776
        %v778 = vpop.xlane.xlu0 %777
        %v779 = vsel %vm639, %v773, -inf
        %780 = vmax.xlane.f32.xlu0 %v779
        %v781 = vpop.xlane.xlu0 %780
        %v782 = vsub.f32 %v770, %v778
        %v783 = vsub.f32 %v773, %v781
        %v784 = vmul.f32 %v782, 1.442695
        %v785 = vpow.pop %v784
        %v786 = vmul.f32 %v783, 1.442695
        %v787 = vpow.pop %v786
        %v788 = vsel %vm639, %v785, 0.0
        %789 = vadd.xlane.f32.xlu0 %v788
        %v790 = vpop.xlane.xlu0 %789
        %v791 = vsel %vm639, %v787, 0.0
        %792 = vadd.xlane.f32.xlu0 %v791
        %v793 = vpop.xlane.xlu0 %792
        %v794 = vrcp.pop %v790
        %v795 = vrcp.pop %v793
        %v796 = vmul.f32 %v785, %v794
        %v797 = vmul.f32 %v787, %v795
        %v798 = vpack.c.bf16 %v797, %v796
        %v801 = vunpack.c.l.b16 %v717
        %v802 = vunpack.c.l.b16 %v718
        %v803 = vpack.c.b16 %v802, %v801
        %804 = vrot.lane.b32.xlu0 %v803, 120
        %v805 = vpop.permute.xlu0 %804
        %v808 = vsel %vm639, %v798, 0
        %810 = vmatprep.subr.bf16.mxu0 0
        %811 = vmatpush1.bf16.msra.mxu0 0
        %812 = vmatprep.subr.bf16.mxu0 0
        %813 = vmatpush1.bf16.msra.mxu0 0
        %814 = vmatprep.subr.bf16.mxu0 0
        %815 = vmatpush1.bf16.msra.mxu0 0
        %816 = vmatprep.subr.bf16.mxu0 0
        %817 = vmatpush1.bf16.msra.mxu0 0
        %818 = vmatprep.subr.bf16.mxu0 0
        %819 = vmatpush1.bf16.msra.mxu0 0
        %820 = vmatprep.subr.bf16.mxu0 0
        %821 = vmatpush1.bf16.msra.mxu0 0
        %822 = vmatprep.subr.bf16.mxu0 0
        %823 = vmatpush1.bf16.msra.mxu0 0
        %824 = vmatprep.subr.bf16.mxu0 0
        %825 = vmatpush1.bf16.msra.mxu0 %v805
        %826 = vmatprep.subr.bf16.mxu0 0
        %827 = vmatpush2.bf16.msra.mxu0 0
        %828 = vmatprep.subr.bf16.mxu0 0
        %829 = vmatpush2.bf16.msra.mxu0 0
        %830 = vmatprep.subr.bf16.mxu0 0
        %831 = vmatpush2.bf16.msra.mxu0 0
        %832 = vmatprep.subr.bf16.mxu0 0
        %833 = vmatpush2.bf16.msra.mxu0 0
        %834 = vmatprep.subr.bf16.mxu0 0
        %835 = vmatpush2.bf16.msra.mxu0 0
        %836 = vmatprep.subr.bf16.mxu0 0
        %837 = vmatpush2.bf16.msra.mxu0 0
        %838 = vmatprep.subr.bf16.mxu0 0
        %839 = vmatpush2.bf16.msra.mxu0 0
        %840 = vmatprep.subr.bf16.mxu0 0
        %841 = vmatpush2.bf16.msra.mxu0 0
        %842 = vmatprep.mubr.bf16.mxu0 0
        %843 = vmatmul.mubr.bf16.gmra.mxu0 %v808
        %v844 = vpop.f32.mrf.mxu0
        %v845 = vadd.f32 0.0, %v844
        %v846 = vpop.f32.mrf.mxu0
        %v847 = vpop.f32.mrf.mxu0
        %v848 = vadd.f32 0.0, %v847
        %v849 = vpop.f32.mrf.mxu0
        %850 = vdwg.mxu0
        %853 = vrot.lane.b32.xlu0 %v845, 8
        %v854 = vpop.permute.xlu0 %853
        %855 = vrot.lane.b32.xlu0 %v848, 8
        %v856 = vpop.permute.xlu0 %855
        %vm859 = vcmask 130112
        %860 = vst.msk [vmem:[#allocation4] sm:$0xff] %vm859, %v854
        %861 = vst.msk [vmem:[#allocation4 + $0x8] sm:$0xff] %vm859, %v856
        %v862 = vld [vmem:[#allocation2] sm:$0xf]
        %v863 = vld [vmem:[#allocation2 + $0x4] sm:$0xf]
        %v864 = vld [vmem:[#allocation3] sm:$0xf]
        %v865 = vld [vmem:[#allocation3 + $0x4] sm:$0xf]
        %866 = vrot.lane.b32.xlu0 %v581, 112
        %v867 = vpop.permute.xlu0 %866
        %v870 = vunpack.c.l.b16 %v862
        %v871 = vunpack.c.l.b16 %v863
        %v872 = vpack.c.b16 %v871, %v870
        %873 = vrot.lane.b32.xlu0 %v872, 112
        %v874 = vpop.permute.xlu0 %873
        %v876 = vsel %vm591, %v867, 0
        %v879 = vsel %vm591, %v874, 0
        %881 = vmatprep.subr.bf16.mxu0 0
        %882 = vmatpush1.bf16.xpose.msra.mxu0 0
        %883 = vmatprep.subr.bf16.mxu0 0
        %884 = vmatpush1.bf16.xpose.msra.mxu0 0
        %885 = vmatprep.subr.bf16.mxu0 0
        %886 = vmatpush1.bf16.xpose.msra.mxu0 0
        %887 = vmatprep.subr.bf16.mxu0 0
        %888 = vmatpush1.bf16.xpose.msra.mxu0 0
        %889 = vmatprep.subr.bf16.mxu0 0
        %890 = vmatpush1.bf16.xpose.msra.mxu0 0
        %891 = vmatprep.subr.bf16.mxu0 0
        %892 = vmatpush1.bf16.xpose.msra.mxu0 0
        %893 = vmatprep.subr.bf16.mxu0 0
        %894 = vmatpush1.bf16.xpose.msra.mxu0 0
        %895 = vmatprep.subr.bf16.mxu0 0
        %896 = vmatpush1.bf16.xpose.msra.mxu0 %v879
        %897 = vmatprep.subr.bf16.mxu0 0
        %898 = vmatpush2.bf16.xpose.msra.mxu0 0
        %899 = vmatprep.subr.bf16.mxu0 0
        %900 = vmatpush2.bf16.xpose.msra.mxu0 0
        %901 = vmatprep.subr.bf16.mxu0 0
        %902 = vmatpush2.bf16.xpose.msra.mxu0 0
        %903 = vmatprep.subr.bf16.mxu0 0
        %904 = vmatpush2.bf16.xpose.msra.mxu0 0
        %905 = vmatprep.subr.bf16.mxu0 0
        %906 = vmatpush2.bf16.xpose.msra.mxu0 0
        %907 = vmatprep.subr.bf16.mxu0 0
        %908 = vmatpush2.bf16.xpose.msra.mxu0 0
        %909 = vmatprep.subr.bf16.mxu0 0
        %910 = vmatpush2.bf16.xpose.msra.mxu0 0
        %911 = vmatprep.subr.bf16.mxu0 0
        %912 = vmatpush2.bf16.xpose.msra.mxu0 0
        %913 = vmatprep.mubr.bf16.mxu0 0
        %914 = vmatmul.mubr.bf16.gmra.mxu0 %v876
        %v915 = vpop.f32.mrf.mxu0
        %v916 = vadd.f32 0.0, %v915
        %v917 = vpop.f32.mrf.mxu0
        %v918 = vpop.f32.mrf.mxu0
        %v919 = vadd.f32 0.0, %v918
        %v920 = vpop.f32.mrf.mxu0
        %921 = vdwg.mxu0
        %v922 = vsel %vm639, %v916, -inf
        %923 = vmax.xlane.f32.xlu0 %v922
        %v924 = vpop.xlane.xlu0 %923
        %v925 = vsel %vm639, %v919, -inf
        %926 = vmax.xlane.f32.xlu0 %v925
        %v927 = vpop.xlane.xlu0 %926
        %v928 = vsub.f32 %v916, %v924
        %v929 = vsub.f32 %v919, %v927
        %v930 = vmul.f32 %v928, 1.442695
        %v931 = vpow.pop %v930
        %v932 = vmul.f32 %v929, 1.442695
        %v933 = vpow.pop %v932
        %v934 = vsel %vm639, %v931, 0.0
        %935 = vadd.xlane.f32.xlu0 %v934
        %v936 = vpop.xlane.xlu0 %935
        %v937 = vsel %vm639, %v933, 0.0
        %938 = vadd.xlane.f32.xlu0 %v937
        %v939 = vpop.xlane.xlu0 %938
        %v940 = vrcp.pop %v936
        %v941 = vrcp.pop %v939
        %v942 = vmul.f32 %v931, %v940
        %v943 = vmul.f32 %v933, %v941
        %v944 = vpack.c.bf16 %v943, %v942
        %v947 = vunpack.c.l.b16 %v864
        %v948 = vunpack.c.l.b16 %v865
        %v949 = vpack.c.b16 %v948, %v947
        %950 = vrot.lane.b32.xlu0 %v949, 112
        %v951 = vpop.permute.xlu0 %950
        %v954 = vsel %vm639, %v944, 0
        %956 = vmatprep.subr.bf16.mxu0 0
        %957 = vmatpush1.bf16.msra.mxu0 0
        %958 = vmatprep.subr.bf16.mxu0 0
        %959 = vmatpush1.bf16.msra.mxu0 0
        %960 = vmatprep.subr.bf16.mxu0 0
        %961 = vmatpush1.bf16.msra.mxu0 0
        %962 = vmatprep.subr.bf16.mxu0 0
        %963 = vmatpush1.bf16.msra.mxu0 0
        %964 = vmatprep.subr.bf16.mxu0 0
        %965 = vmatpush1.bf16.msra.mxu0 0
        %966 = vmatprep.subr.bf16.mxu0 0
        %967 = vmatpush1.bf16.msra.mxu0 0
        %968 = vmatprep.subr.bf16.mxu0 0
        %969 = vmatpush1.bf16.msra.mxu0 0
        %970 = vmatprep.subr.bf16.mxu0 0
        %971 = vmatpush1.bf16.msra.mxu0 %v951
        %972 = vmatprep.subr.bf16.mxu0 0
        %973 = vmatpush2.bf16.msra.mxu0 0
        %974 = vmatprep.subr.bf16.mxu0 0
        %975 = vmatpush2.bf16.msra.mxu0 0
        %976 = vmatprep.subr.bf16.mxu0 0
        %977 = vmatpush2.bf16.msra.mxu0 0
        %978 = vmatprep.subr.bf16.mxu0 0
        %979 = vmatpush2.bf16.msra.mxu0 0
        %980 = vmatprep.subr.bf16.mxu0 0
        %981 = vmatpush2.bf16.msra.mxu0 0
        %982 = vmatprep.subr.bf16.mxu0 0
        %983 = vmatpush2.bf16.msra.mxu0 0
        %984 = vmatprep.subr.bf16.mxu0 0
        %985 = vmatpush2.bf16.msra.mxu0 0
        %986 = vmatprep.subr.bf16.mxu0 0
        %987 = vmatpush2.bf16.msra.mxu0 0
        %988 = vmatprep.mubr.bf16.mxu0 0
        %989 = vmatmul.mubr.bf16.gmra.mxu0 %v954
        %v990 = vpop.f32.mrf.mxu0
        %v991 = vadd.f32 0.0, %v990
        %v992 = vpop.f32.mrf.mxu0
        %v993 = vpop.f32.mrf.mxu0
        %v994 = vadd.f32 0.0, %v993
        %v995 = vpop.f32.mrf.mxu0
        %996 = vdwg.mxu0
        %999 = vrot.lane.b32.xlu0 %v991, 16
        %v1000 = vpop.permute.xlu0 %999
        %1001 = vrot.lane.b32.xlu0 %v994, 16
        %v1002 = vpop.permute.xlu0 %1001
        %vm1005 = vcmask 195712
        %1006 = vst.msk [vmem:[#allocation4] sm:$0xff] %vm1005, %v1000
        %1007 = vst.msk [vmem:[#allocation4 + $0x8] sm:$0xff] %vm1005, %v1002
        %v1008 = vld [vmem:[#allocation2] sm:$0xf]
        %v1009 = vld [vmem:[#allocation2 + $0x4] sm:$0xf]
        %v1010 = vld [vmem:[#allocation3] sm:$0xf]
        %v1011 = vld [vmem:[#allocation3 + $0x4] sm:$0xf]
        %1012 = vrot.lane.b32.xlu0 %v581, 104
        %v1013 = vpop.permute.xlu0 %1012
        %v1016 = vunpack.c.l.b16 %v1008
        %v1017 = vunpack.c.l.b16 %v1009
        %v1018 = vpack.c.b16 %v1017, %v1016
        %1019 = vrot.lane.b32.xlu0 %v1018, 104
        %v1020 = vpop.permute.xlu0 %1019
        %v1022 = vsel %vm591, %v1013, 0
        %v1025 = vsel %vm591, %v1020, 0
        %1027 = vmatprep.subr.bf16.mxu0 0
        %1028 = vmatpush1.bf16.xpose.msra.mxu0 0
        %1029 = vmatprep.subr.bf16.mxu0 0
        %1030 = vmatpush1.bf16.xpose.msra.mxu0 0
        %1031 = vmatprep.subr.bf16.mxu0 0
        %1032 = vmatpush1.bf16.xpose.msra.mxu0 0
        %1033 = vmatprep.subr.bf16.mxu0 0
        %1034 = vmatpush1.bf16.xpose.msra.mxu0 0
        %1035 = vmatprep.subr.bf16.mxu0 0
        %1036 = vmatpush1.bf16.xpose.msra.mxu0 0
        %1037 = vmatprep.subr.bf16.mxu0 0
        %1038 = vmatpush1.bf16.xpose.msra.mxu0 0
        %1039 = vmatprep.subr.bf16.mxu0 0
        %1040 = vmatpush1.bf16.xpose.msra.mxu0 0
        %1041 = vmatprep.subr.bf16.mxu0 0
        %1042 = vmatpush1.bf16.xpose.msra.mxu0 %v1025
        %1043 = vmatprep.subr.bf16.mxu0 0
        %1044 = vmatpush2.bf16.xpose.msra.mxu0 0
        %1045 = vmatprep.subr.bf16.mxu0 0
        %1046 = vmatpush2.bf16.xpose.msra.mxu0 0
        %1047 = vmatprep.subr.bf16.mxu0 0
        %1048 = vmatpush2.bf16.xpose.msra.mxu0 0
        %1049 = vmatprep.subr.bf16.mxu0 0
        %1050 = vmatpush2.bf16.xpose.msra.mxu0 0
        %1051 = vmatprep.subr.bf16.mxu0 0
        %1052 = vmatpush2.bf16.xpose.msra.mxu0 0
        %1053 = vmatprep.subr.bf16.mxu0 0
        %1054 = vmatpush2.bf16.xpose.msra.mxu0 0
        %1055 = vmatprep.subr.bf16.mxu0 0
        %1056 = vmatpush2.bf16.xpose.msra.mxu0 0
        %1057 = vmatprep.subr.bf16.mxu0 0
        %1058 = vmatpush2.bf16.xpose.msra.mxu0 0
        %1059 = vmatprep.mubr.bf16.mxu0 0
        %1060 = vmatmul.mubr.bf16.gmra.mxu0 %v1022
        %v1061 = vpop.f32.mrf.mxu0
        %v1062 = vadd.f32 0.0, %v1061
        %v1063 = vpop.f32.mrf.mxu0
        %v1064 = vpop.f32.mrf.mxu0
        %v1065 = vadd.f32 0.0, %v1064
        %v1066 = vpop.f32.mrf.mxu0
        %1067 = vdwg.mxu0
        %v1068 = vsel %vm639, %v1062, -inf
        %1069 = vmax.xlane.f32.xlu0 %v1068
        %v1070 = vpop.xlane.xlu0 %1069
        %v1071 = vsel %vm639, %v1065, -inf
        %1072 = vmax.xlane.f32.xlu0 %v1071
        %v1073 = vpop.xlane.xlu0 %1072
        %v1074 = vsub.f32 %v1062, %v1070
        %v1075 = vsub.f32 %v1065, %v1073
        %v1076 = vmul.f32 %v1074, 1.442695
        %v1077 = vpow.pop %v1076
        %v1078 = vmul.f32 %v1075, 1.442695
        %v1079 = vpow.pop %v1078
        %v1080 = vsel %vm639, %v1077, 0.0
        %1081 = vadd.xlane.f32.xlu0 %v1080
        %v1082 = vpop.xlane.xlu0 %1081
        %v1083 = vsel %vm639, %v1079, 0.0
        %1084 = vadd.xlane.f32.xlu0 %v1083
        %v1085 = vpop.xlane.xlu0 %1084
        %v1086 = vrcp.pop %v1082
        %v1087 = vrcp.pop %v1085
        %v1088 = vmul.f32 %v1077, %v1086
        %v1089 = vmul.f32 %v1079, %v1087
        %v1090 = vpack.c.bf16 %v1089, %v1088
        %v1093 = vunpack.c.l.b16 %v1010
        %v1094 = vunpack.c.l.b16 %v1011
        %v1095 = vpack.c.b16 %v1094, %v1093
        %1096 = vrot.lane.b32.xlu0 %v1095, 104
        %v1097 = vpop.permute.xlu0 %1096
        %v1100 = vsel %vm639, %v1090, 0
        %1102 = vmatprep.subr.bf16.mxu0 0
        %1103 = vmatpush1.bf16.msra.mxu0 0
        %1104 = vmatprep.subr.bf16.mxu0 0
        %1105 = vmatpush1.bf16.msra.mxu0 0
        %1106 = vmatprep.subr.bf16.mxu0 0
        %1107 = vmatpush1.bf16.msra.mxu0 0
        %1108 = vmatprep.subr.bf16.mxu0 0
        %1109 = vmatpush1.bf16.msra.mxu0 0
        %1110 = vmatprep.subr.bf16.mxu0 0
        %1111 = vmatpush1.bf16.msra.mxu0 0
        %1112 = vmatprep.subr.bf16.mxu0 0
        %1113 = vmatpush1.bf16.msra.mxu0 0
        %1114 = vmatprep.subr.bf16.mxu0 0
        %1115 = vmatpush1.bf16.msra.mxu0 0
        %1116 = vmatprep.subr.bf16.mxu0 0
        %1117 = vmatpush1.bf16.msra.mxu0 %v1097
        %1118 = vmatprep.subr.bf16.mxu0 0
        %1119 = vmatpush2.bf16.msra.mxu0 0
        %1120 = vmatprep.subr.bf16.mxu0 0
        %1121 = vmatpush2.bf16.msra.mxu0 0
        %1122 = vmatprep.subr.bf16.mxu0 0
        %1123 = vmatpush2.bf16.msra.mxu0 0
        %1124 = vmatprep.subr.bf16.mxu0 0
        %1125 = vmatpush2.bf16.msra.mxu0 0
        %1126 = vmatprep.subr.bf16.mxu0 0
        %1127 = vmatpush2.bf16.msra.mxu0 0
        %1128 = vmatprep.subr.bf16.mxu0 0
        %1129 = vmatpush2.bf16.msra.mxu0 0
        %1130 = vmatprep.subr.bf16.mxu0 0
        %1131 = vmatpush2.bf16.msra.mxu0 0
        %1132 = vmatprep.subr.bf16.mxu0 0
        %1133 = vmatpush2.bf16.msra.mxu0 0
        %1134 = vmatprep.mubr.bf16.mxu0 0
        %1135 = vmatmul.mubr.bf16.gmra.mxu0 %v1100
        %v1136 = vpop.f32.mrf.mxu0
        %v1137 = vadd.f32 0.0, %v1136
        %v1138 = vpop.f32.mrf.mxu0
        %v1139 = vpop.f32.mrf.mxu0
        %v1140 = vadd.f32 0.0, %v1139
        %v1141 = vpop.f32.mrf.mxu0
        %1142 = vdwg.mxu0
        %1145 = vrot.lane.b32.xlu0 %v1137, 24
        %v1146 = vpop.permute.xlu0 %1145
        %1147 = vrot.lane.b32.xlu0 %v1140, 24
        %v1148 = vpop.permute.xlu0 %1147
        %vm1151 = vcmask 261312
        %1152 = vst.msk [vmem:[#allocation4] sm:$0xff] %vm1151, %v1146
        %1153 = vst.msk [vmem:[#allocation4 + $0x8] sm:$0xff] %vm1151, %v1148
        %v1154 = vld [vmem:[#allocation2] sm:$0xf]
        %v1155 = vld [vmem:[#allocation2 + $0x4] sm:$0xf]
        %v1156 = vld [vmem:[#allocation3] sm:$0xf]
        %v1157 = vld [vmem:[#allocation3 + $0x4] sm:$0xf]
        %1158 = vrot.lane.b32.xlu0 %v581, 96
        %v1159 = vpop.permute.xlu0 %1158
        %v1162 = vunpack.c.l.b16 %v1154
        %v1163 = vunpack.c.l.b16 %v1155
        %v1164 = vpack.c.b16 %v1163, %v1162
        %1165 = vrot.lane.b32.xlu0 %v1164, 96
        %v1166 = vpop.permute.xlu0 %1165
        %v1168 = vsel %vm591, %v1159, 0
        %v1171 = vsel %vm591, %v1166, 0
        %1173 = vmatprep.subr.bf16.mxu0 0
        %1174 = vmatpush1.bf16.xpose.msra.mxu0 0
        %1175 = vmatprep.subr.bf16.mxu0 0
        %1176 = vmatpush1.bf16.xpose.msra.mxu0 0
        %1177 = vmatprep.subr.bf16.mxu0 0
        %1178 = vmatpush1.bf16.xpose.msra.mxu0 0
        %1179 = vmatprep.subr.bf16.mxu0 0
        %1180 = vmatpush1.bf16.xpose.msra.mxu0 0
        %1181 = vmatprep.subr.bf16.mxu0 0
        %1182 = vmatpush1.bf16.xpose.msra.mxu0 0
        %1183 = vmatprep.subr.bf16.mxu0 0
        %1184 = vmatpush1.bf16.xpose.msra.mxu0 0
        %1185 = vmatprep.subr.bf16.mxu0 0
        %1186 = vmatpush1.bf16.xpose.msra.mxu0 0
        %1187 = vmatprep.subr.bf16.mxu0 0
        %1188 = vmatpush1.bf16.xpose.msra.mxu0 %v1171
        %1189 = vmatprep.subr.bf16.mxu0 0
        %1190 = vmatpush2.bf16.xpose.msra.mxu0 0
        %1191 = vmatprep.subr.bf16.mxu0 0
        %1192 = vmatpush2.bf16.xpose.msra.mxu0 0
        %1193 = vmatprep.subr.bf16.mxu0 0
        %1194 = vmatpush2.bf16.xpose.msra.mxu0 0
        %1195 = vmatprep.subr.bf16.mxu0 0
        %1196 = vmatpush2.bf16.xpose.msra.mxu0 0
        %1197 = vmatprep.subr.bf16.mxu0 0
        %1198 = vmatpush2.bf16.xpose.msra.mxu0 0
        %1199 = vmatprep.subr.bf16.mxu0 0
        %1200 = vmatpush2.bf16.xpose.msra.mxu0 0
        %1201 = vmatprep.subr.bf16.mxu0 0
        %1202 = vmatpush2.bf16.xpose.msra.mxu0 0
        %1203 = vmatprep.subr.bf16.mxu0 0
        %1204 = vmatpush2.bf16.xpose.msra.mxu0 0
        %1205 = vmatprep.mubr.bf16.mxu0 0
        %1206 = vmatmul.mubr.bf16.gmra.mxu0 %v1168
        %v1207 = vpop.f32.mrf.mxu0
        %v1208 = vadd.f32 0.0, %v1207
        %v1209 = vpop.f32.mrf.mxu0
        %v1210 = vpop.f32.mrf.mxu0
        %v1211 = vadd.f32 0.0, %v1210
        %v1212 = vpop.f32.mrf.mxu0
        %1213 = vdwg.mxu0
        %v1214 = vsel %vm639, %v1208, -inf
        %1215 = vmax.xlane.f32.xlu0 %v1214
        %v1216 = vpop.xlane.xlu0 %1215
        %v1217 = vsel %vm639, %v1211, -inf
        %1218 = vmax.xlane.f32.xlu0 %v1217
        %v1219 = vpop.xlane.xlu0 %1218
        %v1220 = vsub.f32 %v1208, %v1216
        %v1221 = vsub.f32 %v1211, %v1219
        %v1222 = vmul.f32 %v1220, 1.442695
        %v1223 = vpow.pop %v1222
        %v1224 = vmul.f32 %v1221, 1.442695
        %v1225 = vpow.pop %v1224
        %v1226 = vsel %vm639, %v1223, 0.0
        %1227 = vadd.xlane.f32.xlu0 %v1226
        %v1228 = vpop.xlane.xlu0 %1227
        %v1229 = vsel %vm639, %v1225, 0.0
        %1230 = vadd.xlane.f32.xlu0 %v1229
        %v1231 = vpop.xlane.xlu0 %1230
        %v1232 = vrcp.pop %v1228
        %v1233 = vrcp.pop %v1231
        %v1234 = vmul.f32 %v1223, %v1232
        %v1235 = vmul.f32 %v1225, %v1233
        %v1236 = vpack.c.bf16 %v1235, %v1234
        %v1239 = vunpack.c.l.b16 %v1156
        %v1240 = vunpack.c.l.b16 %v1157
        %v1241 = vpack.c.b16 %v1240, %v1239
        %1242 = vrot.lane.b32.xlu0 %v1241, 96
        %v1243 = vpop.permute.xlu0 %1242
        %v1246 = vsel %vm639, %v1236, 0
        %1248 = vmatprep.subr.bf16.mxu0 0
        %1249 = vmatpush1.bf16.msra.mxu0 0
        %1250 = vmatprep.subr.bf16.mxu0 0
        %1251 = vmatpush1.bf16.msra.mxu0 0
        %1252 = vmatprep.subr.bf16.mxu0 0
        %1253 = vmatpush1.bf16.msra.mxu0 0
        %1254 = vmatprep.subr.bf16.mxu0 0
        %1255 = vmatpush1.bf16.msra.mxu0 0
        %1256 = vmatprep.subr.bf16.mxu0 0
        %1257 = vmatpush1.bf16.msra.mxu0 0
        %1258 = vmatprep.subr.bf16.mxu0 0
        %1259 = vmatpush1.bf16.msra.mxu0 0
        %1260 = vmatprep.subr.bf16.mxu0 0
        %1261 = vmatpush1.bf16.msra.mxu0 0
        %1262 = vmatprep.subr.bf16.mxu0 0
        %1263 = vmatpush1.bf16.msra.mxu0 %v1243
        %1264 = vmatprep.subr.bf16.mxu0 0
        %1265 = vmatpush2.bf16.msra.mxu0 0
        %1266 = vmatprep.subr.bf16.mxu0 0
        %1267 = vmatpush2.bf16.msra.mxu0 0
        %1268 = vmatprep.subr.bf16.mxu0 0
        %1269 = vmatpush2.bf16.msra.mxu0 0
        %1270 = vmatprep.subr.bf16.mxu0 0
        %1271 = vmatpush2.bf16.msra.mxu0 0
        %1272 = vmatprep.subr.bf16.mxu0 0
        %1273 = vmatpush2.bf16.msra.mxu0 0
        %1274 = vmatprep.subr.bf16.mxu0 0
        %1275 = vmatpush2.bf16.msra.mxu0 0
        %1276 = vmatprep.subr.bf16.mxu0 0
        %1277 = vmatpush2.bf16.msra.mxu0 0
        %1278 = vmatprep.subr.bf16.mxu0 0
        %1279 = vmatpush2.bf16.msra.mxu0 0
        %1280 = vmatprep.mubr.bf16.mxu0 0
        %1281 = vmatmul.mubr.bf16.gmra.mxu0 %v1246
        %v1282 = vpop.f32.mrf.mxu0
        %v1283 = vadd.f32 0.0, %v1282
        %v1284 = vpop.f32.mrf.mxu0
        %v1285 = vpop.f32.mrf.mxu0
        %v1286 = vadd.f32 0.0, %v1285
        %v1287 = vpop.f32.mrf.mxu0
        %1288 = vdwg.mxu0
        %1291 = vrot.lane.b32.xlu0 %v1283, 32
        %v1292 = vpop.permute.xlu0 %1291
        %1293 = vrot.lane.b32.xlu0 %v1286, 32
        %v1294 = vpop.permute.xlu0 %1293
        %vm1297 = vcmask 326912
        %1298 = vst.msk [vmem:[#allocation4] sm:$0xff] %vm1297, %v1292
        %1299 = vst.msk [vmem:[#allocation4 + $0x8] sm:$0xff] %vm1297, %v1294
        %v1300 = vld [vmem:[#allocation2] sm:$0xf]
        %v1301 = vld [vmem:[#allocation2 + $0x4] sm:$0xf]
        %v1302 = vld [vmem:[#allocation3] sm:$0xf]
        %v1303 = vld [vmem:[#allocation3 + $0x4] sm:$0xf]
        %1304 = vrot.lane.b32.xlu0 %v581, 88
        %v1305 = vpop.permute.xlu0 %1304
        %v1308 = vunpack.c.l.b16 %v1300
        %v1309 = vunpack.c.l.b16 %v1301
        %v1310 = vpack.c.b16 %v1309, %v1308
        %1311 = vrot.lane.b32.xlu0 %v1310, 88
        %v1312 = vpop.permute.xlu0 %1311
        %v1314 = vsel %vm591, %v1305, 0
        %v1317 = vsel %vm591, %v1312, 0
        %1319 = vmatprep.subr.bf16.mxu0 0
        %1320 = vmatpush1.bf16.xpose.msra.mxu0 0
        %1321 = vmatprep.subr.bf16.mxu0 0
        %1322 = vmatpush1.bf16.xpose.msra.mxu0 0
        %1323 = vmatprep.subr.bf16.mxu0 0
        %1324 = vmatpush1.bf16.xpose.msra.mxu0 0
        %1325 = vmatprep.subr.bf16.mxu0 0
        %1326 = vmatpush1.bf16.xpose.msra.mxu0 0
        %1327 = vmatprep.subr.bf16.mxu0 0
        %1328 = vmatpush1.bf16.xpose.msra.mxu0 0
        %1329 = vmatprep.subr.bf16.mxu0 0
        %1330 = vmatpush1.bf16.xpose.msra.mxu0 0
        %1331 = vmatprep.subr.bf16.mxu0 0
        %1332 = vmatpush1.bf16.xpose.msra.mxu0 0
        %1333 = vmatprep.subr.bf16.mxu0 0
        %1334 = vmatpush1.bf16.xpose.msra.mxu0 %v1317
        %1335 = vmatprep.subr.bf16.mxu0 0
        %1336 = vmatpush2.bf16.xpose.msra.mxu0 0
        %1337 = vmatprep.subr.bf16.mxu0 0
        %1338 = vmatpush2.bf16.xpose.msra.mxu0 0
        %1339 = vmatprep.subr.bf16.mxu0 0
        %1340 = vmatpush2.bf16.xpose.msra.mxu0 0
        %1341 = vmatprep.subr.bf16.mxu0 0
        %1342 = vmatpush2.bf16.xpose.msra.mxu0 0
        %1343 = vmatprep.subr.bf16.mxu0 0
        %1344 = vmatpush2.bf16.xpose.msra.mxu0 0
        %1345 = vmatprep.subr.bf16.mxu0 0
        %1346 = vmatpush2.bf16.xpose.msra.mxu0 0
        %1347 = vmatprep.subr.bf16.mxu0 0
        %1348 = vmatpush2.bf16.xpose.msra.mxu0 0
        %1349 = vmatprep.subr.bf16.mxu0 0
        %1350 = vmatpush2.bf16.xpose.msra.mxu0 0
        %1351 = vmatprep.mubr.bf16.mxu0 0
        %1352 = vmatmul.mubr.bf16.gmra.mxu0 %v1314
        %v1353 = vpop.f32.mrf.mxu0
        %v1354 = vadd.f32 0.0, %v1353
        %v1355 = vpop.f32.mrf.mxu0
        %v1356 = vpop.f32.mrf.mxu0
        %v1357 = vadd.f32 0.0, %v1356
        %v1358 = vpop.f32.mrf.mxu0
        %1359 = vdwg.mxu0
        %v1360 = vsel %vm639, %v1354, -inf
        %1361 = vmax.xlane.f32.xlu0 %v1360
        %v1362 = vpop.xlane.xlu0 %1361
        %v1363 = vsel %vm639, %v1357, -inf
        %1364 = vmax.xlane.f32.xlu0 %v1363
        %v1365 = vpop.xlane.xlu0 %1364
        %v1366 = vsub.f32 %v1354, %v1362
        %v1367 = vsub.f32 %v1357, %v1365
        %v1368 = vmul.f32 %v1366, 1.442695
        %v1369 = vpow.pop %v1368
        %v1370 = vmul.f32 %v1367, 1.442695
        %v1371 = vpow.pop %v1370
        %v1372 = vsel %vm639, %v1369, 0.0
        %1373 = vadd.xlane.f32.xlu0 %v1372
        %v1374 = vpop.xlane.xlu0 %1373
        %v1375 = vsel %vm639, %v1371, 0.0
        %1376 = vadd.xlane.f32.xlu0 %v1375
        %v1377 = vpop.xlane.xlu0 %1376
        %v1378 = vrcp.pop %v1374
        %v1379 = vrcp.pop %v1377
        %v1380 = vmul.f32 %v1369, %v1378
        %v1381 = vmul.f32 %v1371, %v1379
        %v1382 = vpack.c.bf16 %v1381, %v1380
        %v1385 = vunpack.c.l.b16 %v1302
        %v1386 = vunpack.c.l.b16 %v1303
        %v1387 = vpack.c.b16 %v1386, %v1385
        %1388 = vrot.lane.b32.xlu0 %v1387, 88
        %v1389 = vpop.permute.xlu0 %1388
        %v1392 = vsel %vm639, %v1382, 0
        %1394 = vmatprep.subr.bf16.mxu0 0
        %1395 = vmatpush1.bf16.msra.mxu0 0
        %1396 = vmatprep.subr.bf16.mxu0 0
        %1397 = vmatpush1.bf16.msra.mxu0 0
        %1398 = vmatprep.subr.bf16.mxu0 0
        %1399 = vmatpush1.bf16.msra.mxu0 0
        %1400 = vmatprep.subr.bf16.mxu0 0
        %1401 = vmatpush1.bf16.msra.mxu0 0
        %1402 = vmatprep.subr.bf16.mxu0 0
        %1403 = vmatpush1.bf16.msra.mxu0 0
        %1404 = vmatprep.subr.bf16.mxu0 0
        %1405 = vmatpush1.bf16.msra.mxu0 0
        %1406 = vmatprep.subr.bf16.mxu0 0
        %1407 = vmatpush1.bf16.msra.mxu0 0
        %1408 = vmatprep.subr.bf16.mxu0 0
        %1409 = vmatpush1.bf16.msra.mxu0 %v1389
        %1410 = vmatprep.subr.bf16.mxu0 0
        %1411 = vmatpush2.bf16.msra.mxu0 0
        %1412 = vmatprep.subr.bf16.mxu0 0
        %1413 = vmatpush2.bf16.msra.mxu0 0
        %1414 = vmatprep.subr.bf16.mxu0 0
        %1415 = vmatpush2.bf16.msra.mxu0 0
        %1416 = vmatprep.subr.bf16.mxu0 0
        %1417 = vmatpush2.bf16.msra.mxu0 0
        %1418 = vmatprep.subr.bf16.mxu0 0
        %1419 = vmatpush2.bf16.msra.mxu0 0
        %1420 = vmatprep.subr.bf16.mxu0 0
        %1421 = vmatpush2.bf16.msra.mxu0 0
        %1422 = vmatprep.subr.bf16.mxu0 0
        %1423 = vmatpush2.bf16.msra.mxu0 0
        %1424 = vmatprep.subr.bf16.mxu0 0
        %1425 = vmatpush2.bf16.msra.mxu0 0
        %1426 = vmatprep.mubr.bf16.mxu0 0
        %1427 = vmatmul.mubr.bf16.gmra.mxu0 %v1392
        %v1428 = vpop.f32.mrf.mxu0
        %v1429 = vadd.f32 0.0, %v1428
        %v1430 = vpop.f32.mrf.mxu0
        %v1431 = vpop.f32.mrf.mxu0
        %v1432 = vadd.f32 0.0, %v1431
        %v1433 = vpop.f32.mrf.mxu0
        %1434 = vdwg.mxu0
        %1437 = vrot.lane.b32.xlu0 %v1429, 40
        %v1438 = vpop.permute.xlu0 %1437
        %1439 = vrot.lane.b32.xlu0 %v1432, 40
        %v1440 = vpop.permute.xlu0 %1439
        %vm1443 = vcmask 392512
        %1444 = vst.msk [vmem:[#allocation4] sm:$0xff] %vm1443, %v1438
        %1445 = vst.msk [vmem:[#allocation4 + $0x8] sm:$0xff] %vm1443, %v1440
        %v1446 = vld [vmem:[#allocation2] sm:$0xf]
        %v1447 = vld [vmem:[#allocation2 + $0x4] sm:$0xf]
        %v1448 = vld [vmem:[#allocation3] sm:$0xf]
        %v1449 = vld [vmem:[#allocation3 + $0x4] sm:$0xf]
        %1450 = vrot.lane.b32.xlu0 %v581, 80
        %v1451 = vpop.permute.xlu0 %1450
        %v1454 = vunpack.c.l.b16 %v1446
        %v1455 = vunpack.c.l.b16 %v1447
        %v1456 = vpack.c.b16 %v1455, %v1454
        %1457 = vrot.lane.b32.xlu0 %v1456, 80
        %v1458 = vpop.permute.xlu0 %1457
        %v1460 = vsel %vm591, %v1451, 0
        %v1463 = vsel %vm591, %v1458, 0
        %1465 = vmatprep.subr.bf16.mxu0 0
        %1466 = vmatpush1.bf16.xpose.msra.mxu0 0
        %1467 = vmatprep.subr.bf16.mxu0 0
        %1468 = vmatpush1.bf16.xpose.msra.mxu0 0
        %1469 = vmatprep.subr.bf16.mxu0 0
        %1470 = vmatpush1.bf16.xpose.msra.mxu0 0
        %1471 = vmatprep.subr.bf16.mxu0 0
        %1472 = vmatpush1.bf16.xpose.msra.mxu0 0
        %1473 = vmatprep.subr.bf16.mxu0 0
        %1474 = vmatpush1.bf16.xpose.msra.mxu0 0
        %1475 = vmatprep.subr.bf16.mxu0 0
        %1476 = vmatpush1.bf16.xpose.msra.mxu0 0
        %1477 = vmatprep.subr.bf16.mxu0 0
        %1478 = vmatpush1.bf16.xpose.msra.mxu0 0
        %1479 = vmatprep.subr.bf16.mxu0 0
        %1480 = vmatpush1.bf16.xpose.msra.mxu0 %v1463
        %1481 = vmatprep.subr.bf16.mxu0 0
        %1482 = vmatpush2.bf16.xpose.msra.mxu0 0
        %1483 = vmatprep.subr.bf16.mxu0 0
        %1484 = vmatpush2.bf16.xpose.msra.mxu0 0
        %1485 = vmatprep.subr.bf16.mxu0 0
        %1486 = vmatpush2.bf16.xpose.msra.mxu0 0
        %1487 = vmatprep.subr.bf16.mxu0 0
        %1488 = vmatpush2.bf16.xpose.msra.mxu0 0
        %1489 = vmatprep.subr.bf16.mxu0 0
        %1490 = vmatpush2.bf16.xpose.msra.mxu0 0
        %1491 = vmatprep.subr.bf16.mxu0 0
        %1492 = vmatpush2.bf16.xpose.msra.mxu0 0
        %1493 = vmatprep.subr.bf16.mxu0 0
        %1494 = vmatpush2.bf16.xpose.msra.mxu0 0
        %1495 = vmatprep.subr.bf16.mxu0 0
        %1496 = vmatpush2.bf16.xpose.msra.mxu0 0
        %1497 = vmatprep.mubr.bf16.mxu0 0
        %1498 = vmatmul.mubr.bf16.gmra.mxu0 %v1460
        %v1499 = vpop.f32.mrf.mxu0
        %v1500 = vadd.f32 0.0, %v1499
        %v1501 = vpop.f32.mrf.mxu0
        %v1502 = vpop.f32.mrf.mxu0
        %v1503 = vadd.f32 0.0, %v1502
        %v1504 = vpop.f32.mrf.mxu0
        %1505 = vdwg.mxu0
        %v1506 = vsel %vm639, %v1500, -inf
        %1507 = vmax.xlane.f32.xlu0 %v1506
        %v1508 = vpop.xlane.xlu0 %1507
        %v1509 = vsel %vm639, %v1503, -inf
        %1510 = vmax.xlane.f32.xlu0 %v1509
        %v1511 = vpop.xlane.xlu0 %1510
        %v1512 = vsub.f32 %v1500, %v1508
        %v1513 = vsub.f32 %v1503, %v1511
        %v1514 = vmul.f32 %v1512, 1.442695
        %v1515 = vpow.pop %v1514
        %v1516 = vmul.f32 %v1513, 1.442695
        %v1517 = vpow.pop %v1516
        %v1518 = vsel %vm639, %v1515, 0.0
        %1519 = vadd.xlane.f32.xlu0 %v1518
        %v1520 = vpop.xlane.xlu0 %1519
        %v1521 = vsel %vm639, %v1517, 0.0
        %1522 = vadd.xlane.f32.xlu0 %v1521
        %v1523 = vpop.xlane.xlu0 %1522
        %v1524 = vrcp.pop %v1520
        %v1525 = vrcp.pop %v1523
        %v1526 = vmul.f32 %v1515, %v1524
        %v1527 = vmul.f32 %v1517, %v1525
        %v1528 = vpack.c.bf16 %v1527, %v1526
        %v1531 = vunpack.c.l.b16 %v1448
        %v1532 = vunpack.c.l.b16 %v1449
        %v1533 = vpack.c.b16 %v1532, %v1531
        %1534 = vrot.lane.b32.xlu0 %v1533, 80
        %v1535 = vpop.permute.xlu0 %1534
        %v1538 = vsel %vm639, %v1528, 0
        %1540 = vmatprep.subr.bf16.mxu0 0
        %1541 = vmatpush1.bf16.msra.mxu0 0
        %1542 = vmatprep.subr.bf16.mxu0 0
        %1543 = vmatpush1.bf16.msra.mxu0 0
        %1544 = vmatprep.subr.bf16.mxu0 0
        %1545 = vmatpush1.bf16.msra.mxu0 0
        %1546 = vmatprep.subr.bf16.mxu0 0
        %1547 = vmatpush1.bf16.msra.mxu0 0
        %1548 = vmatprep.subr.bf16.mxu0 0
        %1549 = vmatpush1.bf16.msra.mxu0 0
        %1550 = vmatprep.subr.bf16.mxu0 0
        %1551 = vmatpush1.bf16.msra.mxu0 0
        %1552 = vmatprep.subr.bf16.mxu0 0
        %1553 = vmatpush1.bf16.msra.mxu0 0
        %1554 = vmatprep.subr.bf16.mxu0 0
        %1555 = vmatpush1.bf16.msra.mxu0 %v1535
        %1556 = vmatprep.subr.bf16.mxu0 0
        %1557 = vmatpush2.bf16.msra.mxu0 0
        %1558 = vmatprep.subr.bf16.mxu0 0
        %1559 = vmatpush2.bf16.msra.mxu0 0
        %1560 = vmatprep.subr.bf16.mxu0 0
        %1561 = vmatpush2.bf16.msra.mxu0 0
        %1562 = vmatprep.subr.bf16.mxu0 0
        %1563 = vmatpush2.bf16.msra.mxu0 0
        %1564 = vmatprep.subr.bf16.mxu0 0
        %1565 = vmatpush2.bf16.msra.mxu0 0
        %1566 = vmatprep.subr.bf16.mxu0 0
        %1567 = vmatpush2.bf16.msra.mxu0 0
        %1568 = vmatprep.subr.bf16.mxu0 0
        %1569 = vmatpush2.bf16.msra.mxu0 0
        %1570 = vmatprep.subr.bf16.mxu0 0
        %1571 = vmatpush2.bf16.msra.mxu0 0
        %1572 = vmatprep.mubr.bf16.mxu0 0
        %1573 = vmatmul.mubr.bf16.gmra.mxu0 %v1538
        %v1574 = vpop.f32.mrf.mxu0
        %v1575 = vadd.f32 0.0, %v1574
        %v1576 = vpop.f32.mrf.mxu0
        %v1577 = vpop.f32.mrf.mxu0
        %v1578 = vadd.f32 0.0, %v1577
        %v1579 = vpop.f32.mrf.mxu0
        %1580 = vdwg.mxu0
        %1583 = vrot.lane.b32.xlu0 %v1575, 48
        %v1584 = vpop.permute.xlu0 %1583
        %1585 = vrot.lane.b32.xlu0 %v1578, 48
        %v1586 = vpop.permute.xlu0 %1585
        %vm1589 = vcmask 458112
        %1590 = vst.msk [vmem:[#allocation4] sm:$0xff] %vm1589, %v1584
        %1591 = vst.msk [vmem:[#allocation4 + $0x8] sm:$0xff] %vm1589, %v1586
        %v1592 = vld [vmem:[#allocation2] sm:$0xf]
        %v1593 = vld [vmem:[#allocation2 + $0x4] sm:$0xf]
        %v1594 = vld [vmem:[#allocation3] sm:$0xf]
        %v1595 = vld [vmem:[#allocation3 + $0x4] sm:$0xf]
        %1596 = vrot.lane.b32.xlu0 %v581, 72
        %v1597 = vpop.permute.xlu0 %1596
        %v1600 = vunpack.c.l.b16 %v1592
        %v1601 = vunpack.c.l.b16 %v1593
        %v1602 = vpack.c.b16 %v1601, %v1600
        %1603 = vrot.lane.b32.xlu0 %v1602, 72
        %v1604 = vpop.permute.xlu0 %1603
        %v1606 = vsel %vm591, %v1597, 0
        %v1609 = vsel %vm591, %v1604, 0
        %1611 = vmatprep.subr.bf16.mxu0 0
        %1612 = vmatpush1.bf16.xpose.msra.mxu0 0
        %1613 = vmatprep.subr.bf16.mxu0 0
        %1614 = vmatpush1.bf16.xpose.msra.mxu0 0
        %1615 = vmatprep.subr.bf16.mxu0 0
        %1616 = vmatpush1.bf16.xpose.msra.mxu0 0
        %1617 = vmatprep.subr.bf16.mxu0 0
        %1618 = vmatpush1.bf16.xpose.msra.mxu0 0
        %1619 = vmatprep.subr.bf16.mxu0 0
        %1620 = vmatpush1.bf16.xpose.msra.mxu0 0
        %1621 = vmatprep.subr.bf16.mxu0 0
        %1622 = vmatpush1.bf16.xpose.msra.mxu0 0
        %1623 = vmatprep.subr.bf16.mxu0 0
        %1624 = vmatpush1.bf16.xpose.msra.mxu0 0
        %1625 = vmatprep.subr.bf16.mxu0 0
        %1626 = vmatpush1.bf16.xpose.msra.mxu0 %v1609
        %1627 = vmatprep.subr.bf16.mxu0 0
        %1628 = vmatpush2.bf16.xpose.msra.mxu0 0
        %1629 = vmatprep.subr.bf16.mxu0 0
        %1630 = vmatpush2.bf16.xpose.msra.mxu0 0
        %1631 = vmatprep.subr.bf16.mxu0 0
        %1632 = vmatpush2.bf16.xpose.msra.mxu0 0
        %1633 = vmatprep.subr.bf16.mxu0 0
        %1634 = vmatpush2.bf16.xpose.msra.mxu0 0
        %1635 = vmatprep.subr.bf16.mxu0 0
        %1636 = vmatpush2.bf16.xpose.msra.mxu0 0
        %1637 = vmatprep.subr.bf16.mxu0 0
        %1638 = vmatpush2.bf16.xpose.msra.mxu0 0
        %1639 = vmatprep.subr.bf16.mxu0 0
        %1640 = vmatpush2.bf16.xpose.msra.mxu0 0
        %1641 = vmatprep.subr.bf16.mxu0 0
        %1642 = vmatpush2.bf16.xpose.msra.mxu0 0
        %1643 = vmatprep.mubr.bf16.mxu0 0
        %1644 = vmatmul.mubr.bf16.gmra.mxu0 %v1606
        %v1645 = vpop.f32.mrf.mxu0
        %v1646 = vadd.f32 0.0, %v1645
        %v1647 = vpop.f32.mrf.mxu0
        %v1648 = vpop.f32.mrf.mxu0
        %v1649 = vadd.f32 0.0, %v1648
        %v1650 = vpop.f32.mrf.mxu0
        %1651 = vdwg.mxu0
        %v1652 = vsel %vm639, %v1646, -inf
        %1653 = vmax.xlane.f32.xlu0 %v1652
        %v1654 = vpop.xlane.xlu0 %1653
        %v1655 = vsel %vm639, %v1649, -inf
        %1656 = vmax.xlane.f32.xlu0 %v1655
        %v1657 = vpop.xlane.xlu0 %1656
        %v1658 = vsub.f32 %v1646, %v1654
        %v1659 = vsub.f32 %v1649, %v1657
        %v1660 = vmul.f32 %v1658, 1.442695
        %v1661 = vpow.pop %v1660
        %v1662 = vmul.f32 %v1659, 1.442695
        %v1663 = vpow.pop %v1662
        %v1664 = vsel %vm639, %v1661, 0.0
        %1665 = vadd.xlane.f32.xlu0 %v1664
        %v1666 = vpop.xlane.xlu0 %1665
        %v1667 = vsel %vm639, %v1663, 0.0
        %1668 = vadd.xlane.f32.xlu0 %v1667
        %v1669 = vpop.xlane.xlu0 %1668
        %v1670 = vrcp.pop %v1666
        %v1671 = vrcp.pop %v1669
        %v1672 = vmul.f32 %v1661, %v1670
        %v1673 = vmul.f32 %v1663, %v1671
        %v1674 = vpack.c.bf16 %v1673, %v1672
        %v1677 = vunpack.c.l.b16 %v1594
        %v1678 = vunpack.c.l.b16 %v1595
        %v1679 = vpack.c.b16 %v1678, %v1677
        %1680 = vrot.lane.b32.xlu0 %v1679, 72
        %v1681 = vpop.permute.xlu0 %1680
        %v1684 = vsel %vm639, %v1674, 0
        %1686 = vmatprep.subr.bf16.mxu0 0
        %1687 = vmatpush1.bf16.msra.mxu0 0
        %1688 = vmatprep.subr.bf16.mxu0 0
        %1689 = vmatpush1.bf16.msra.mxu0 0
        %1690 = vmatprep.subr.bf16.mxu0 0
        %1691 = vmatpush1.bf16.msra.mxu0 0
        %1692 = vmatprep.subr.bf16.mxu0 0
        %1693 = vmatpush1.bf16.msra.mxu0 0
        %1694 = vmatprep.subr.bf16.mxu0 0
        %1695 = vmatpush1.bf16.msra.mxu0 0
        %1696 = vmatprep.subr.bf16.mxu0 0
        %1697 = vmatpush1.bf16.msra.mxu0 0
        %1698 = vmatprep.subr.bf16.mxu0 0
        %1699 = vmatpush1.bf16.msra.mxu0 0
        %1700 = vmatprep.subr.bf16.mxu0 0
        %1701 = vmatpush1.bf16.msra.mxu0 %v1681
        %1702 = vmatprep.subr.bf16.mxu0 0
        %1703 = vmatpush2.bf16.msra.mxu0 0
        %1704 = vmatprep.subr.bf16.mxu0 0
        %1705 = vmatpush2.bf16.msra.mxu0 0
        %1706 = vmatprep.subr.bf16.mxu0 0
        %1707 = vmatpush2.bf16.msra.mxu0 0
        %1708 = vmatprep.subr.bf16.mxu0 0
        %1709 = vmatpush2.bf16.msra.mxu0 0
        %1710 = vmatprep.subr.bf16.mxu0 0
        %1711 = vmatpush2.bf16.msra.mxu0 0
        %1712 = vmatprep.subr.bf16.mxu0 0
        %1713 = vmatpush2.bf16.msra.mxu0 0
        %1714 = vmatprep.subr.bf16.mxu0 0
        %1715 = vmatpush2.bf16.msra.mxu0 0
        %1716 = vmatprep.subr.bf16.mxu0 0
        %1717 = vmatpush2.bf16.msra.mxu0 0
        %1718 = vmatprep.mubr.bf16.mxu0 0
        %1719 = vmatmul.mubr.bf16.gmra.mxu0 %v1684
        %v1720 = vpop.f32.mrf.mxu0
        %v1721 = vadd.f32 0.0, %v1720
        %v1722 = vpop.f32.mrf.mxu0
        %v1723 = vpop.f32.mrf.mxu0
        %v1724 = vadd.f32 0.0, %v1723
        %v1725 = vpop.f32.mrf.mxu0
        %1726 = vdwg.mxu0
        %1729 = vrot.lane.b32.xlu0 %v1721, 56
        %v1730 = vpop.permute.xlu0 %1729
        %1731 = vrot.lane.b32.xlu0 %v1724, 56
        %v1732 = vpop.permute.xlu0 %1731
        %vm1735 = vcmask 523712
        %1736 = vst.msk [vmem:[#allocation4] sm:$0xff] %vm1735, %v1730
        %1737 = vst.msk [vmem:[#allocation4 + $0x8] sm:$0xff] %vm1735, %v1732
        %v1738 = vld [vmem:[%s5] sm:$0x1]
        %v1739 = vld [vmem:[#allocation4] sm:$0xff]
        %v1740 = vld [vmem:[#allocation4 + $0x8] sm:$0xff]
        %v1741 = vpack.c.bf16 %v1740, %v1739
        %v1742 = vld [vmem:[#allocation11] sm:$0xf]
        %v1743 = vld [vmem:[#allocation11 + $0x4] sm:$0xf]
        %v1744 = vld [vmem:[#allocation11 + $0x8] sm:$0xf]
        %v1745 = vld [vmem:[#allocation11 + $0xc] sm:$0xf]
        %v1746 = vld [vmem:[#allocation11 + $0x10] sm:$0xf]
        %v1747 = vld [vmem:[#allocation11 + $0x14] sm:$0xf]
        %v1748 = vld [vmem:[#allocation11 + $0x18] sm:$0xf]
        %v1749 = vld [vmem:[#allocation11 + $0x1c] sm:$0xf]
        %v1750 = vld [vmem:[#allocation13] sm:$0xf]
        %v1751 = vld [vmem:[#allocation13 + $0x4] sm:$0xf]
        %v1752 = vld [vmem:[#allocation13 + $0x8] sm:$0xf]
        %v1753 = vld [vmem:[#allocation13 + $0xc] sm:$0xf]
        %v1754 = vld [vmem:[#allocation13 + $0x10] sm:$0xf]
        %v1755 = vld [vmem:[#allocation13 + $0x14] sm:$0xf]
        %v1756 = vld [vmem:[#allocation13 + $0x18] sm:$0xf]
        %v1757 = vld [vmem:[#allocation13 + $0x1c] sm:$0xf]
        %v1759 = vlaneseq
        %v1760 = vshrl.u32 %v1759, 7
        %v1761 = vsub.s32 0, %v1760
        %v1762 = vrot.slane %v1738, %v1761
        %v1772 = vunpack.c.l.b16 %v1750
        %v1773 = vunpack.c.l.b16 %v1751
        %v1774 = vunpack.c.l.b16 %v1752
        %v1775 = vunpack.c.l.b16 %v1753
        %v1776 = vunpack.c.l.b16 %v1754
        %v1777 = vunpack.c.l.b16 %v1755
        %v1778 = vunpack.c.l.b16 %v1756
        %v1779 = vunpack.c.l.b16 %v1757
        %v1780 = vpack.c.b16 %v1773, %v1772
        %v1781 = vpack.c.b16 %v1775, %v1774
        %v1782 = vpack.c.b16 %v1777, %v1776
        %v1783 = vpack.c.b16 %v1779, %v1778
        %1788 = vmatprep.subr.bf16.mxu0 0
        %1789 = vmatpush1.bf16.msra.mxu0 0
        %1790 = vmatprep.subr.bf16.mxu0 0
        %1791 = vmatpush1.bf16.msra.mxu0 0
        %1792 = vmatprep.subr.bf16.mxu0 0
        %1793 = vmatpush1.bf16.msra.mxu0 0
        %1794 = vmatprep.subr.bf16.mxu0 0
        %1795 = vmatpush1.bf16.msra.mxu0 0
        %1796 = vmatprep.subr.bf16.mxu0 0
        %1797 = vmatpush1.bf16.msra.mxu0 %v1783
        %1798 = vmatprep.subr.bf16.mxu0 0
        %1799 = vmatpush1.bf16.msra.mxu0 %v1782
        %1800 = vmatprep.subr.bf16.mxu0 0
        %1801 = vmatpush1.bf16.msra.mxu0 %v1781
        %1802 = vmatprep.subr.bf16.mxu0 0
        %1803 = vmatpush1.bf16.msra.mxu0 %v1780
        %1804 = vmatprep.subr.bf16.mxu0 0
        %1805 = vmatpush2.bf16.msra.mxu0 0
        %1806 = vmatprep.subr.bf16.mxu0 0
        %1807 = vmatpush2.bf16.msra.mxu0 0
        %1808 = vmatprep.subr.bf16.mxu0 0
        %1809 = vmatpush2.bf16.msra.mxu0 0
        %1810 = vmatprep.subr.bf16.mxu0 0
        %1811 = vmatpush2.bf16.msra.mxu0 0
        %1812 = vmatprep.subr.bf16.mxu0 0
        %1813 = vmatpush2.bf16.msra.mxu0 0
        %1814 = vmatprep.subr.bf16.mxu0 0
        %1815 = vmatpush2.bf16.msra.mxu0 0
        %1816 = vmatprep.subr.bf16.mxu0 0
        %1817 = vmatpush2.bf16.msra.mxu0 0
        %1818 = vmatprep.subr.bf16.mxu0 0
        %1819 = vmatpush2.bf16.msra.mxu0 0
        %1820 = vmatprep.mubr.bf16.mxu0 0
        %1821 = vmatmul.mubr.bf16.gmra.mxu0 %v538
        %v1822 = vpop.f32.mrf.mxu0
        %v1823 = vadd.f32 %v1762, %v1822
        %v1824 = vpop.f32.mrf.mxu0
        %v1825 = vpop.f32.mrf.mxu0
        %v1826 = vadd.f32 %v1762, %v1825
        %v1827 = vpop.f32.mrf.mxu0
        %1828 = vdwg.mxu0
        %1829 = vst.msk [vmem:[%s374] sm:$0xff] %vm536, %v1823
        %1830 = vst.msk [vmem:[%s374 + $0x8] sm:$0xff] %vm536, %v1826
        %v1839 = vunpack.c.l.b16 %v1742
        %v1840 = vunpack.c.l.b16 %v1743
        %v1841 = vunpack.c.l.b16 %v1744
        %v1842 = vunpack.c.l.b16 %v1745
        %v1843 = vunpack.c.l.b16 %v1746
        %v1844 = vunpack.c.l.b16 %v1747
        %v1845 = vunpack.c.l.b16 %v1748
        %v1846 = vunpack.c.l.b16 %v1749
        %v1847 = vpack.c.b16 %v1840, %v1839
        %v1848 = vpack.c.b16 %v1842, %v1841
        %v1849 = vpack.c.b16 %v1844, %v1843
        %v1850 = vpack.c.b16 %v1846, %v1845
        %v1856 = vsel %vm536, %v1741, 0
        %1858 = vmatprep.subr.bf16.mxu0 0
        %1859 = vmatpush1.bf16.msra.mxu0 0
        %1860 = vmatprep.subr.bf16.mxu0 0
        %1861 = vmatpush1.bf16.msra.mxu0 0
        %1862 = vmatprep.subr.bf16.mxu0 0
        %1863 = vmatpush1.bf16.msra.mxu0 0
        %1864 = vmatprep.subr.bf16.mxu0 0
        %1865 = vmatpush1.bf16.msra.mxu0 0
        %1866 = vmatprep.subr.bf16.mxu0 0
        %1867 = vmatpush1.bf16.msra.mxu0 %v1850
        %1868 = vmatprep.subr.bf16.mxu0 0
        %1869 = vmatpush1.bf16.msra.mxu0 %v1849
        %1870 = vmatprep.subr.bf16.mxu0 0
        %1871 = vmatpush1.bf16.msra.mxu0 %v1848
        %1872 = vmatprep.subr.bf16.mxu0 0
        %1873 = vmatpush1.bf16.msra.mxu0 %v1847
        %1874 = vmatprep.subr.bf16.mxu0 0
        %1875 = vmatpush2.bf16.msra.mxu0 0
        %1876 = vmatprep.subr.bf16.mxu0 0
        %1877 = vmatpush2.bf16.msra.mxu0 0
        %1878 = vmatprep.subr.bf16.mxu0 0
        %1879 = vmatpush2.bf16.msra.mxu0 0
        %1880 = vmatprep.subr.bf16.mxu0 0
        %1881 = vmatpush2.bf16.msra.mxu0 0
        %1882 = vmatprep.subr.bf16.mxu0 0
        %1883 = vmatpush2.bf16.msra.mxu0 0
        %1884 = vmatprep.subr.bf16.mxu0 0
        %1885 = vmatpush2.bf16.msra.mxu0 0
        %1886 = vmatprep.subr.bf16.mxu0 0
        %1887 = vmatpush2.bf16.msra.mxu0 0
        %1888 = vmatprep.subr.bf16.mxu0 0
        %1889 = vmatpush2.bf16.msra.mxu0 0
        %1890 = vmatprep.mubr.bf16.mxu0 0
        %1891 = vmatmul.mubr.bf16.gmra.mxu0 %v1856
        %v1892 = vpop.f32.mrf.mxu0
        %v1893 = vadd.f32 %v1762, %v1892
        %v1894 = vpop.f32.mrf.mxu0
        %v1895 = vpop.f32.mrf.mxu0
        %v1896 = vadd.f32 %v1762, %v1895
        %v1897 = vpop.f32.mrf.mxu0
        %1898 = vdwg.mxu0
        %1899 = vst.msk [vmem:[%s381] sm:$0xff] %vm536, %v1893
        %1900 = vst.msk [vmem:[%s381 + $0x8] sm:$0xff] %vm536, %v1896
        %s1901 = sand.u32 %s183, 1
        %s1902 = scalar_lea.sflag [#allocation7], %s1901
        %s1903 = sand.u32 %s183, 1
        %s1904 = smul.addr %s1903, 16
        %s1905 = scalar_lea.vmem [#allocation14], %s1904
        %s1906 = sand.u32 %s211, 1
        %s1907 = scalar_lea.sflag [#allocation16], %s1906
        %s1908 = sand.u32 %s211, 1
        %s1909 = smul.addr %s1908, 16
        %s1910 = scalar_lea.vmem [#allocation15], %s1909
        // Predicated region
        $region69: #{tpu_custom_call.1} parent=43 // pred_check
          %p1911 = pneg %p193
        $region70: #{tpu_custom_call.1} parent=43 // pred_check_branch
          %1913 = sbr.rel (%p1911) target = $region72
        $region71: #{tpu_custom_call.1} parent=43 // pred_region
          %s1914 = smul.u32 2, %s35
          %s1916 = ssub.s32 256, 256
          %1917 = vsyncadd %s1902, %s1916
          %s1918 = smul.addr %s34, 2
          %s1919 = sadd.s32 %s1914, %s1918
          %s1920 = smul.addr %s1919, 128
          %s1921 = scalar_lea.hbm %s6, %s1920
          %s1922 = sshll.u32 %s1905, 4
          %s1923 = int_to_ptr.vmem [resolvable:$true] %s1922
          %1928 = dma.vmem_to_hbm [thread:$0]  %s1923, 256, %s1921, %s1902, 128, 128, 8
        $region72: #{tpu_custom_call.1} parent=43 // pred_fallthru
          _
        // Predicated region
        $region73: #{tpu_custom_call.1} parent=43 // pred_check
          %p1929 = pneg %p221
        $region74: #{tpu_custom_call.1} parent=43 // pred_check_branch
          %1931 = sbr.rel (%p1929) target = $region76
        $region75: #{tpu_custom_call.1} parent=43 // pred_region
          %s1932 = smul.u32 2, %s35
          %s1934 = ssub.s32 256, 256
          %1935 = vsyncadd %s1907, %s1934
          %s1936 = smul.addr %s34, 2
          %s1937 = sadd.s32 %s1932, %s1936
          %s1938 = smul.addr %s1937, 128
          %s1939 = scalar_lea.hbm %s7, %s1938
          %s1940 = sshll.u32 %s1910, 4
          %s1941 = int_to_ptr.vmem [resolvable:$true] %s1940
          %1946 = dma.vmem_to_hbm [thread:$0]  %s1941, 256, %s1939, %s1907, 128, 128, 8
        $region76: #{tpu_custom_call.1} parent=43 // pred_fallthru
          _
      $region44: #{tpu_custom_call.1} parent=5 // pred_fallthru
        _
      %p1947 = scmp.le.s32.totalorder 2, %s25
      // Predicated region
      $region77: #{tpu_custom_call.1} parent=5 // pred_check
        %p1948 = pneg %p1947
      $region78: #{tpu_custom_call.1} parent=5 // pred_check_branch
        %1950 = sbr.rel (%p1948) target = $region80
      $region79: #{tpu_custom_call.1} parent=5 // pred_region
        %s1951 = ssub.s32 %s25, 2
        // Predicated region
        $region81: #{tpu_custom_call.1} parent=79 // pred_check
          %p1952 = pneg %p199
        $region82: #{tpu_custom_call.1} parent=79 // pred_check_branch
          %1954 = sbr.rel (%p1952) target = $region84
        $region83: #{tpu_custom_call.1} parent=79 // pred_region
          %s1955 = sand.u32 %s184, 1
          %s1956 = scalar_lea.sflag [#allocation7], %s1955
          %s1957 = sand.u32 %s184, 1
          %s1958 = smul.addr %s1957, 16
          %s1959 = scalar_lea.vmem [#allocation14], %s1958
          %1960 = dma.done %s1956, 256
        $region84: #{tpu_custom_call.1} parent=79 // pred_fallthru
          _
        // Predicated region
        $region85: #{tpu_custom_call.1} parent=79 // pred_check
          %p1961 = pneg %p227
        $region86: #{tpu_custom_call.1} parent=79 // pred_check_branch
          %1963 = sbr.rel (%p1961) target = $region88
        $region87: #{tpu_custom_call.1} parent=79 // pred_region
          %s1964 = sand.u32 %s212, 1
          %s1965 = scalar_lea.sflag [#allocation16], %s1964
          %s1966 = sand.u32 %s212, 1
          %s1967 = smul.addr %s1966, 16
          %s1968 = scalar_lea.vmem [#allocation15], %s1967
          %1969 = dma.done %s1965, 256
        $region88: #{tpu_custom_call.1} parent=79 // pred_fallthru
          _
      $region80: #{tpu_custom_call.1} parent=5 // pred_fallthru
        _
    $region6: #{tpu_custom_call.1} parent=1 // loop_footer
      %s29 = sadd.s32 1, %s25
    $region7: #{tpu_custom_call.1} parent=1 // loop_footer_branch
      %24 = sbr.rel target = $region3
    $region8: #{tpu_custom_call.1} parent=1 // loop_exit
      _
    %1970 = vsyncpa [#allocation6], 1
    %s1971 = scalar_lea.sflag [#allocation6], 1
    %1972 = vsyncpa %s1971, 1
    %1973 = vsyncpa [#allocation9], 1
    %1974 = vsyncpa [#allocation12], 1
    %1975 = vsyncpa [#allocation7], 1
    %s1976 = scalar_lea.sflag [#allocation7], 1
    %1977 = vsyncpa %s1976, 1
    %1978 = vsyncpa [#allocation16], 1
    %s1979 = scalar_lea.sflag [#allocation16], 1
    %1980 = vsyncpa %s1979, 1

</llo_original>
